<compile_context>
chip_gen: v7x
topology: tpu7x:2x2x1
jax: 0.10.0
libtpu: 0.0.40
codegen_flags: <defaults>
</compile_context>

<pallas_src>
import math
import functools

import jax
import jax.numpy as jnp
from jax.experimental import pallas as pl
from jax.experimental.pallas import tpu as pltpu


def s4d_kernel(z0_ref, w_ref, sr_ref, si_ref, k_ref, *, l_chunk, n_chunk, n_l_tiles):
    """K[h, l0 + lc*Lc + p] = sum_n Re( Z0_hn(p) * S_j,hn * W_hn^lc ).

    z0_ref: (tile_h, 2, N2, Lc)  anchor 2*C'*exp(dtA*p), p in [0, Lc)   [real, imag]
    w_ref : (tile_h, 2, N2, Lc)  step exp(dtA*Lc), lane-broadcast       [real, imag]
    sr/si : (1, tile_h, N2, 1)   per-L-tile scale exp(dtA * j*tile_l)
    k_ref : (tile_h, tile_l)
    """
    N2 = z0_ref.shape[2]
    Lc = l_chunk
    tile_l = k_ref.shape[-1]
    n_l_chunks = tile_l // Lc
    n_n_chunks = N2 // n_chunk
    apply_scale = n_l_tiles > 1      # S_0 == 1: statically dead when single L tile

    acc = [None] * n_l_chunks
    for c in range(n_n_chunks):                      # static unroll over mode chunks
        sl = slice(c * n_chunk, (c + 1) * n_chunk)   # sublane-aligned mode slice
        z0r = z0_ref[:, 0, sl, :]                    # (tile_h, nc, Lc)
        z0i = z0_ref[:, 1, sl, :]
        if apply_scale:
            sr = sr_ref[0, :, sl, :]                 # (tile_h, nc, 1) lane-broadcasts
            si = si_ref[0, :, sl, :]
            zr = z0r * sr - z0i * si                 # re-anchor this L tile
            zi = z0r * si + z0i * sr
        else:
            zr, zi = z0r, z0i
        if n_l_chunks > 1:                           # W is dead code otherwise
            wr = w_ref[:, 0, sl, :]                  # already lane-broadcast
            wi = w_ref[:, 1, sl, :]
        for lc in range(n_l_chunks):                 # static unroll along L
            contrib = jnp.sum(zr, axis=1)            # (tile_h, Lc) sublane reduce (XLU)
            acc[lc] = contrib if c == 0 else acc[lc] + contrib
            if lc + 1 < n_l_chunks:
                zr, zi = (zr * wr - zi * wi,         # z <- z * W, pure VPU work
                          zr * wi + zi * wr)
    for lc in range(n_l_chunks):                     # exactly one store per l_chunk
        k_ref[:, lc * Lc:(lc + 1) * Lc] = acc[lc]


@functools.partial(jax.jit,
                   static_argnames=("L", "tile_h", "tile_l", "l_chunk", "n_chunk"))
def s4d_forward(log_dt, log_A_real, A_imag, C_real, C_imag, *,
                L, tile_h=8, tile_l=None, l_chunk=128, n_chunk=8):
    H, N2 = log_A_real.shape
    if tile_l is None:
        # Large L tiles amortize per-grid-step overhead; capped so the fully unrolled
        # recurrence keeps <= 8 accumulator vregs (stay well under the 64-vreg ceiling).
        tile_l = min(L, 8 * l_chunk)
    tile_l = min(tile_l, L)
    n_chunk = min(n_chunk, N2)

    assert H % tile_h == 0, "H must be a multiple of tile_h"
    assert L % tile_l == 0, "L must be a multiple of tile_l"
    assert tile_l % l_chunk == 0 and l_chunk % 128 == 0, "l_chunk must be 128-aligned"
    assert N2 % n_chunk == 0, "N//2 must be a multiple of n_chunk"
    assert n_chunk % 8 == 0 or n_chunk == N2, "mode chunk must be sublane-aligned"

    n_l_tiles = L // tile_l
    Lc = l_chunk
    f32 = jnp.float32

    # ---------------- XLA-side prologue: every transcendental lives here --------------
    dt = jnp.exp(log_dt.astype(f32))[:, None]                          # (H, 1)
    A = -jnp.exp(log_A_real.astype(f32)) + 1j * A_imag.astype(f32)     # (H, N2)
    dtA = A * dt                                                       # (H, N2)
    C = C_real.astype(f32) + 1j * C_imag.astype(f32)
    Cp = 2.0 * C * (jnp.exp(dtA) - 1.0) / A            # factor 2 folded in (perf review)
    pos = jnp.arange(Lc, dtype=f32)
    Z0 = Cp[:, :, None] * jnp.exp(dtA[:, :, None] * pos)               # (H, N2, Lc)
    W = jnp.broadcast_to(jnp.exp(dtA * float(Lc))[:, :, None], (H, N2, Lc))
    tile_off = jnp.arange(n_l_tiles, dtype=f32) * float(tile_l)
    S = jnp.exp(dtA[None, :, :] * tile_off[:, None, None])             # (nLt, H, N2)

    z0_packed = jnp.stack([jnp.real(Z0), jnp.imag(Z0)], axis=1).astype(f32)  # (H,2,N2,Lc)
    w_packed = jnp.stack([jnp.real(W), jnp.imag(W)], axis=1).astype(f32)     # (H,2,N2,Lc)
    s_real = jnp.real(S)[..., None].astype(f32)                              # (nLt,H,N2,1)
    s_imag = jnp.imag(S)[..., None].astype(f32)                              # (nLt,H,N2,1)

    grid = (H // tile_h, n_l_tiles)
    z0_spec = pl.BlockSpec((tile_h, 2, N2, Lc), lambda i, j: (i, 0, 0, 0))
    w_spec = pl.BlockSpec((tile_h, 2, N2, Lc), lambda i, j: (i, 0, 0, 0))
    s_spec = pl.BlockSpec((1, tile_h, N2, 1), lambda i, j: (j, i, 0, 0))
    out_spec = pl.BlockSpec((tile_h, tile_l), lambda i, j: (i, j))

    kernel = functools.partial(s4d_kernel, l_chunk=l_chunk, n_chunk=n_chunk,
                               n_l_tiles=n_l_tiles)

    cost = pl.CostEstimate(
        flops=8 * H * N2 * L,                          # complex recurrence + reduce
        transcendentals=0,                             # all EUP work moved to XLA
        bytes_accessed=4 * (2 * H * 2 * N2 * Lc + 2 * n_l_tiles * H * N2 + H * L),
    )

    return pl.pallas_call(
        kernel,
        out_shape=jax.ShapeDtypeStruct((H, L), f32),
        grid_spec=pltpu.PrefetchScalarGridSpec(
            num_scalar_prefetch=0,
            grid=grid,
            in_specs=[z0_spec, w_spec, s_spec, s_spec],
            out_specs=out_spec,
        ),
        compiler_params=pltpu.CompilerParams(
            dimension_semantics=("parallel", "parallel"),
            vmem_limit_bytes=32 * 1024 * 1024,
        ),
        cost_estimate=cost,
    )(z0_packed, w_packed, s_real, s_imag)


def s4d_reference(log_dt, log_A_real, A_imag, C_real, C_imag, L):
    """Pure-JAX complex reference mirroring the PyTorch S4DKernel.forward."""
    dt = jnp.exp(log_dt)                                        # (H,)
    C = C_real + 1j * C_imag                                    # (H, N2)
    A = -jnp.exp(log_A_real) + 1j * A_imag                      # (H, N2)
    dtA = A * dt[:, None]                                       # (H, N2)
    K = dtA[:, :, None] * jnp.arange(L, dtype=jnp.float32)      # (H, N2, L)
    C = C * (jnp.exp(dtA) - 1.0) / A
    K = 2 * jnp.einsum("hn,hnl->hl", C, jnp.exp(K)).real
    return K.astype(jnp.float32)


if __name__ == "__main__":
    # Module hyper-params (small, deterministic).  L chosen so the default config has
    # a multi-chunk in-kernel recurrence and the alternate configs exercise the
    # multi-L-tile (re-anchoring) and anchor-only paths.
    d_model = 16          # H
    N = 64                # state size -> N2 = 32 complex modes
    L = 512               # requested kernel length
    dt_min, dt_max = 0.001, 0.1
    H, N2 = d_model, N // 2

    key = jax.random.PRNGKey(0)
    k_dt, k_cr, k_ci = jax.random.split(key, 3)

    # Deterministic parameter init mirroring S4DKernel.__init__:
    log_dt = (jax.random.uniform(k_dt, (H,), dtype=jnp.float32)
              * (math.log(dt_max) - math.log(dt_min)) + math.log(dt_min))
    C_real = jax.random.normal(k_cr, (H, N2), dtype=jnp.float32)
    C_imag = jax.random.normal(k_ci, (H, N2), dtype=jnp.float32)
    log_A_real = jnp.log(0.5 * jnp.ones((H, N2), dtype=jnp.float32))
    A_imag = math.pi * jnp.broadcast_to(
        jnp.arange(N2, dtype=jnp.float32)[None, :], (H, N2))

    K_ref = s4d_reference(log_dt, log_A_real, A_imag, C_real, C_imag, L)

    # Default config: tile_l = L (single L tile, grid (2, 1); the 2 "parallel" H steps
    # keep both v7x TensorCores busy), 4 recurrence chunks per tile.
    K = jax.block_until_ready(
        s4d_forward(log_dt, log_A_real, A_imag, C_real, C_imag, L=L))
    assert K.shape == (H, L)
    assert jnp.allclose(K, K_ref, rtol=1e-3, atol=1e-3), (
        float(jnp.max(jnp.abs(K - K_ref))))

    # Multi-L-tile config: exercises the per-tile re-anchoring scale S path.
    K2 = jax.block_until_ready(
        s4d_forward(log_dt, log_A_real, A_imag, C_real, C_imag, L=L, tile_l=256))
    assert jnp.allclose(K2, K_ref, rtol=1e-3, atol=1e-3), (
        float(jnp.max(jnp.abs(K2 - K_ref))))

    # Anchor-only config (tile_l == l_chunk): exercises the n_l_chunks == 1 guard.
    K3 = jax.block_until_ready(
        s4d_forward(log_dt, log_A_real, A_imag, C_real, C_imag, L=L, tile_l=128))
    assert jnp.allclose(K3, K_ref, rtol=1e-3, atol=1e-3), (
        float(jnp.max(jnp.abs(K3 - K_ref))))

    print("KERNEL_OK")
</pallas_src>

<mosaic_0001>
module attributes {stable_mosaic.version = 11 : i64} {
  func.func @s4d_kernel(%arg0: i32, %arg1: i32, %arg2: memref<8x2x32x128xf32, #tpu.memory_space<vmem>>, %arg3: memref<8x2x32x128xf32, #tpu.memory_space<vmem>>, %arg4: memref<1x8x32x1xf32, #tpu.memory_space<vmem>>, %arg5: memref<1x8x32x1xf32, #tpu.memory_space<vmem>>, %arg6: memref<8x512xf32, #tpu.memory_space<vmem>>) attributes {dimension_semantics = [#tpu.dimension_semantics<parallel>, #tpu.dimension_semantics<parallel>], iteration_bounds = array<i64: 2, 1>, scalar_prefetch = 0 : i64, scratch_operands = 0 : i64, tpu.core_type = #tpu.core_type<tc>, window_params = [{transform_indices = @transform_0, window_bounds = array<i64: 8, 2, 32, 128>}, {transform_indices = @transform_1, window_bounds = array<i64: 8, 2, 32, 128>}, {transform_indices = @transform_2, window_bounds = array<i64: 1, 8, 32, 1>}, {transform_indices = @transform_3, window_bounds = array<i64: 1, 8, 32, 1>}, {transform_indices = @transform_4, window_bounds = array<i64: 8, 512>}]} {
    %c0 = arith.constant 0 : index
    %c0_0 = arith.constant 0 : index
    %c0_1 = arith.constant 0 : index
    %c0_2 = arith.constant 0 : index
    %0 = vector.load %arg2[%c0, %c0_0, %c0_1, %c0_2] : memref<8x2x32x128xf32, #tpu.memory_space<vmem>>, vector<8x1x8x128xf32>
    %1 = vector.shape_cast %0 : vector<8x1x8x128xf32> to vector<8x8x128xf32>
    %c0_3 = arith.constant 0 : index
    %c1 = arith.constant 1 : index
    %c0_4 = arith.constant 0 : index
    %c0_5 = arith.constant 0 : index
    %2 = vector.load %arg2[%c0_3, %c1, %c0_4, %c0_5] : memref<8x2x32x128xf32, #tpu.memory_space<vmem>>, vector<8x1x8x128xf32>
    %3 = vector.shape_cast %2 : vector<8x1x8x128xf32> to vector<8x8x128xf32>
    %c0_6 = arith.constant 0 : index
    %c0_7 = arith.constant 0 : index
    %c0_8 = arith.constant 0 : index
    %c0_9 = arith.constant 0 : index
    %4 = vector.load %arg3[%c0_6, %c0_7, %c0_8, %c0_9] : memref<8x2x32x128xf32, #tpu.memory_space<vmem>>, vector<8x1x8x128xf32>
    %5 = vector.shape_cast %4 : vector<8x1x8x128xf32> to vector<8x8x128xf32>
    %c0_10 = arith.constant 0 : index
    %c1_11 = arith.constant 1 : index
    %c0_12 = arith.constant 0 : index
    %c0_13 = arith.constant 0 : index
    %6 = vector.load %arg3[%c0_10, %c1_11, %c0_12, %c0_13] : memref<8x2x32x128xf32, #tpu.memory_space<vmem>>, vector<8x1x8x128xf32>
    %7 = vector.shape_cast %6 : vector<8x1x8x128xf32> to vector<8x8x128xf32>
    %cst = arith.constant dense<0.000000e+00> : vector<8x128xf32>
    %8 = vector.multi_reduction <add>, %1, %cst [1] : vector<8x8x128xf32> to vector<8x128xf32>
    %9 = arith.mulf %1, %5 : vector<8x8x128xf32>
    %10 = arith.mulf %3, %7 : vector<8x8x128xf32>
    %11 = arith.subf %9, %10 : vector<8x8x128xf32>
    %12 = arith.mulf %1, %7 : vector<8x8x128xf32>
    %13 = arith.mulf %3, %5 : vector<8x8x128xf32>
    %14 = arith.addf %12, %13 : vector<8x8x128xf32>
    %cst_14 = arith.constant dense<0.000000e+00> : vector<8x128xf32>
    %15 = vector.multi_reduction <add>, %11, %cst_14 [1] : vector<8x8x128xf32> to vector<8x128xf32>
    %16 = arith.mulf %11, %5 : vector<8x8x128xf32>
    %17 = arith.mulf %14, %7 : vector<8x8x128xf32>
    %18 = arith.subf %16, %17 : vector<8x8x128xf32>
    %19 = arith.mulf %11, %7 : vector<8x8x128xf32>
    %20 = arith.mulf %14, %5 : vector<8x8x128xf32>
    %21 = arith.addf %19, %20 : vector<8x8x128xf32>
    %cst_15 = arith.constant dense<0.000000e+00> : vector<8x128xf32>
    %22 = vector.multi_reduction <add>, %18, %cst_15 [1] : vector<8x8x128xf32> to vector<8x128xf32>
    %23 = arith.mulf %18, %5 : vector<8x8x128xf32>
    %24 = arith.mulf %21, %7 : vector<8x8x128xf32>
    %25 = arith.subf %23, %24 : vector<8x8x128xf32>
    %cst_16 = arith.constant dense<0.000000e+00> : vector<8x128xf32>
    %26 = vector.multi_reduction <add>, %25, %cst_16 [1] : vector<8x8x128xf32> to vector<8x128xf32>
    %c0_17 = arith.constant 0 : index
    %c0_18 = arith.constant 0 : index
    %c8 = arith.constant 8 : index
    %c0_19 = arith.constant 0 : index
    %27 = vector.load %arg2[%c0_17, %c0_18, %c8, %c0_19] : memref<8x2x32x128xf32, #tpu.memory_space<vmem>>, vector<8x1x8x128xf32>
    %28 = vector.shape_cast %27 : vector<8x1x8x128xf32> to vector<8x8x128xf32>
    %c0_20 = arith.constant 0 : index
    %c1_21 = arith.constant 1 : index
    %c8_22 = arith.constant 8 : index
    %c0_23 = arith.constant 0 : index
    %29 = vector.load %arg2[%c0_20, %c1_21, %c8_22, %c0_23] : memref<8x2x32x128xf32, #tpu.memory_space<vmem>>, vector<8x1x8x128xf32>
    %30 = vector.shape_cast %29 : vector<8x1x8x128xf32> to vector<8x8x128xf32>
    %c0_24 = arith.constant 0 : index
    %c0_25 = arith.constant 0 : index
    %c8_26 = arith.constant 8 : index
    %c0_27 = arith.constant 0 : index
    %31 = vector.load %arg3[%c0_24, %c0_25, %c8_26, %c0_27] : memref<8x2x32x128xf32, #tpu.memory_space<vmem>>, vector<8x1x8x128xf32>
    %32 = vector.shape_cast %31 : vector<8x1x8x128xf32> to vector<8x8x128xf32>
    %c0_28 = arith.constant 0 : index
    %c1_29 = arith.constant 1 : index
    %c8_30 = arith.constant 8 : index
    %c0_31 = arith.constant 0 : index
    %33 = vector.load %arg3[%c0_28, %c1_29, %c8_30, %c0_31] : memref<8x2x32x128xf32, #tpu.memory_space<vmem>>, vector<8x1x8x128xf32>
    %34 = vector.shape_cast %33 : vector<8x1x8x128xf32> to vector<8x8x128xf32>
    %cst_32 = arith.constant dense<0.000000e+00> : vector<8x128xf32>
    %35 = vector.multi_reduction <add>, %28, %cst_32 [1] : vector<8x8x128xf32> to vector<8x128xf32>
    %36 = arith.addf %8, %35 : vector<8x128xf32>
    %37 = arith.mulf %28, %32 : vector<8x8x128xf32>
    %38 = arith.mulf %30, %34 : vector<8x8x128xf32>
    %39 = arith.subf %37, %38 : vector<8x8x128xf32>
    %40 = arith.mulf %28, %34 : vector<8x8x128xf32>
    %41 = arith.mulf %30, %32 : vector<8x8x128xf32>
    %42 = arith.addf %40, %41 : vector<8x8x128xf32>
    %cst_33 = arith.constant dense<0.000000e+00> : vector<8x128xf32>
    %43 = vector.multi_reduction <add>, %39, %cst_33 [1] : vector<8x8x128xf32> to vector<8x128xf32>
    %44 = arith.addf %15, %43 : vector<8x128xf32>
    %45 = arith.mulf %39, %32 : vector<8x8x128xf32>
    %46 = arith.mulf %42, %34 : vector<8x8x128xf32>
    %47 = arith.subf %45, %46 : vector<8x8x128xf32>
    %48 = arith.mulf %39, %34 : vector<8x8x128xf32>
    %49 = arith.mulf %42, %32 : vector<8x8x128xf32>
    %50 = arith.addf %48, %49 : vector<8x8x128xf32>
    %cst_34 = arith.constant dense<0.000000e+00> : vector<8x128xf32>
    %51 = vector.multi_reduction <add>, %47, %cst_34 [1] : vector<8x8x128xf32> to vector<8x128xf32>
    %52 = arith.addf %22, %51 : vector<8x128xf32>
    %53 = arith.mulf %47, %32 : vector<8x8x128xf32>
    %54 = arith.mulf %50, %34 : vector<8x8x128xf32>
    %55 = arith.subf %53, %54 : vector<8x8x128xf32>
    %cst_35 = arith.constant dense<0.000000e+00> : vector<8x128xf32>
    %56 = vector.multi_reduction <add>, %55, %cst_35 [1] : vector<8x8x128xf32> to vector<8x128xf32>
    %57 = arith.addf %26, %56 : vector<8x128xf32>
    %c0_36 = arith.constant 0 : index
    %c0_37 = arith.constant 0 : index
    %c16 = arith.constant 16 : index
    %c0_38 = arith.constant 0 : index
    %58 = vector.load %arg2[%c0_36, %c0_37, %c16, %c0_38] : memref<8x2x32x128xf32, #tpu.memory_space<vmem>>, vector<8x1x8x128xf32>
    %59 = vector.shape_cast %58 : vector<8x1x8x128xf32> to vector<8x8x128xf32>
    %c0_39 = arith.constant 0 : index
    %c1_40 = arith.constant 1 : index
    %c16_41 = arith.constant 16 : index
    %c0_42 = arith.constant 0 : index
    %60 = vector.load %arg2[%c0_39, %c1_40, %c16_41, %c0_42] : memref<8x2x32x128xf32, #tpu.memory_space<vmem>>, vector<8x1x8x128xf32>
    %61 = vector.shape_cast %60 : vector<8x1x8x128xf32> to vector<8x8x128xf32>
    %c0_43 = arith.constant 0 : index
    %c0_44 = arith.constant 0 : index
    %c16_45 = arith.constant 16 : index
    %c0_46 = arith.constant 0 : index
    %62 = vector.load %arg3[%c0_43, %c0_44, %c16_45, %c0_46] : memref<8x2x32x128xf32, #tpu.memory_space<vmem>>, vector<8x1x8x128xf32>
    %63 = vector.shape_cast %62 : vector<8x1x8x128xf32> to vector<8x8x128xf32>
    %c0_47 = arith.constant 0 : index
    %c1_48 = arith.constant 1 : index
    %c16_49 = arith.constant 16 : index
    %c0_50 = arith.constant 0 : index
    %64 = vector.load %arg3[%c0_47, %c1_48, %c16_49, %c0_50] : memref<8x2x32x128xf32, #tpu.memory_space<vmem>>, vector<8x1x8x128xf32>
    %65 = vector.shape_cast %64 : vector<8x1x8x128xf32> to vector<8x8x128xf32>
    %cst_51 = arith.constant dense<0.000000e+00> : vector<8x128xf32>
    %66 = vector.multi_reduction <add>, %59, %cst_51 [1] : vector<8x8x128xf32> to vector<8x128xf32>
    %67 = arith.addf %36, %66 : vector<8x128xf32>
    %68 = arith.mulf %59, %63 : vector<8x8x128xf32>
    %69 = arith.mulf %61, %65 : vector<8x8x128xf32>
    %70 = arith.subf %68, %69 : vector<8x8x128xf32>
    %71 = arith.mulf %59, %65 : vector<8x8x128xf32>
    %72 = arith.mulf %61, %63 : vector<8x8x128xf32>
    %73 = arith.addf %71, %72 : vector<8x8x128xf32>
    %cst_52 = arith.constant dense<0.000000e+00> : vector<8x128xf32>
    %74 = vector.multi_reduction <add>, %70, %cst_52 [1] : vector<8x8x128xf32> to vector<8x128xf32>
    %75 = arith.addf %44, %74 : vector<8x128xf32>
    %76 = arith.mulf %70, %63 : vector<8x8x128xf32>
    %77 = arith.mulf %73, %65 : vector<8x8x128xf32>
    %78 = arith.subf %76, %77 : vector<8x8x128xf32>
    %79 = arith.mulf %70, %65 : vector<8x8x128xf32>
    %80 = arith.mulf %73, %63 : vector<8x8x128xf32>
    %81 = arith.addf %79, %80 : vector<8x8x128xf32>
    %cst_53 = arith.constant dense<0.000000e+00> : vector<8x128xf32>
    %82 = vector.multi_reduction <add>, %78, %cst_53 [1] : vector<8x8x128xf32> to vector<8x128xf32>
    %83 = arith.addf %52, %82 : vector<8x128xf32>
    %84 = arith.mulf %78, %63 : vector<8x8x128xf32>
    %85 = arith.mulf %81, %65 : vector<8x8x128xf32>
    %86 = arith.subf %84, %85 : vector<8x8x128xf32>
    %cst_54 = arith.constant dense<0.000000e+00> : vector<8x128xf32>
    %87 = vector.multi_reduction <add>, %86, %cst_54 [1] : vector<8x8x128xf32> to vector<8x128xf32>
    %88 = arith.addf %57, %87 : vector<8x128xf32>
    %c0_55 = arith.constant 0 : index
    %c0_56 = arith.constant 0 : index
    %c24 = arith.constant 24 : index
    %c0_57 = arith.constant 0 : index
    %89 = vector.load %arg2[%c0_55, %c0_56, %c24, %c0_57] : memref<8x2x32x128xf32, #tpu.memory_space<vmem>>, vector<8x1x8x128xf32>
    %90 = vector.shape_cast %89 : vector<8x1x8x128xf32> to vector<8x8x128xf32>
    %c0_58 = arith.constant 0 : index
    %c1_59 = arith.constant 1 : index
    %c24_60 = arith.constant 24 : index
    %c0_61 = arith.constant 0 : index
    %91 = vector.load %arg2[%c0_58, %c1_59, %c24_60, %c0_61] : memref<8x2x32x128xf32, #tpu.memory_space<vmem>>, vector<8x1x8x128xf32>
    %92 = vector.shape_cast %91 : vector<8x1x8x128xf32> to vector<8x8x128xf32>
    %c0_62 = arith.constant 0 : index
    %c0_63 = arith.constant 0 : index
    %c24_64 = arith.constant 24 : index
    %c0_65 = arith.constant 0 : index
    %93 = vector.load %arg3[%c0_62, %c0_63, %c24_64, %c0_65] : memref<8x2x32x128xf32, #tpu.memory_space<vmem>>, vector<8x1x8x128xf32>
    %94 = vector.shape_cast %93 : vector<8x1x8x128xf32> to vector<8x8x128xf32>
    %c0_66 = arith.constant 0 : index
    %c1_67 = arith.constant 1 : index
    %c24_68 = arith.constant 24 : index
    %c0_69 = arith.constant 0 : index
    %95 = vector.load %arg3[%c0_66, %c1_67, %c24_68, %c0_69] : memref<8x2x32x128xf32, #tpu.memory_space<vmem>>, vector<8x1x8x128xf32>
    %96 = vector.shape_cast %95 : vector<8x1x8x128xf32> to vector<8x8x128xf32>
    %cst_70 = arith.constant dense<0.000000e+00> : vector<8x128xf32>
    %97 = vector.multi_reduction <add>, %90, %cst_70 [1] : vector<8x8x128xf32> to vector<8x128xf32>
    %98 = arith.addf %67, %97 : vector<8x128xf32>
    %99 = arith.mulf %90, %94 : vector<8x8x128xf32>
    %100 = arith.mulf %92, %96 : vector<8x8x128xf32>
    %101 = arith.subf %99, %100 : vector<8x8x128xf32>
    %102 = arith.mulf %90, %96 : vector<8x8x128xf32>
    %103 = arith.mulf %92, %94 : vector<8x8x128xf32>
    %104 = arith.addf %102, %103 : vector<8x8x128xf32>
    %cst_71 = arith.constant dense<0.000000e+00> : vector<8x128xf32>
    %105 = vector.multi_reduction <add>, %101, %cst_71 [1] : vector<8x8x128xf32> to vector<8x128xf32>
    %106 = arith.addf %75, %105 : vector<8x128xf32>
    %107 = arith.mulf %101, %94 : vector<8x8x128xf32>
    %108 = arith.mulf %104, %96 : vector<8x8x128xf32>
    %109 = arith.subf %107, %108 : vector<8x8x128xf32>
    %110 = arith.mulf %101, %96 : vector<8x8x128xf32>
    %111 = arith.mulf %104, %94 : vector<8x8x128xf32>
    %112 = arith.addf %110, %111 : vector<8x8x128xf32>
    %cst_72 = arith.constant dense<0.000000e+00> : vector<8x128xf32>
    %113 = vector.multi_reduction <add>, %109, %cst_72 [1] : vector<8x8x128xf32> to vector<8x128xf32>
    %114 = arith.addf %83, %113 : vector<8x128xf32>
    %115 = arith.mulf %109, %94 : vector<8x8x128xf32>
    %116 = arith.mulf %112, %96 : vector<8x8x128xf32>
    %117 = arith.subf %115, %116 : vector<8x8x128xf32>
    %cst_73 = arith.constant dense<0.000000e+00> : vector<8x128xf32>
    %118 = vector.multi_reduction <add>, %117, %cst_73 [1] : vector<8x8x128xf32> to vector<8x128xf32>
    %119 = arith.addf %88, %118 : vector<8x128xf32>
    %c0_74 = arith.constant 0 : index
    %c0_75 = arith.constant 0 : index
    %120 = vector.load %arg6[%c0_74, %c0_75] : memref<8x512xf32, #tpu.memory_space<vmem>>, vector<8x128xf32>
    tpu.vector_store %arg6[%c0_74, %c0_75], %98 {strides = array<i32>} : memref<8x512xf32, #tpu.memory_space<vmem>>, vector<8x128xf32>,
    %c0_76 = arith.constant 0 : index
    %c128 = arith.constant 128 : index
    %121 = vector.load %arg6[%c0_76, %c128] : memref<8x512xf32, #tpu.memory_space<vmem>>, vector<8x128xf32>
    tpu.vector_store %arg6[%c0_76, %c128], %106 {strides = array<i32>} : memref<8x512xf32, #tpu.memory_space<vmem>>, vector<8x128xf32>,
    %c0_77 = arith.constant 0 : index
    %c256 = arith.constant 256 : index
    %122 = vector.load %arg6[%c0_77, %c256] : memref<8x512xf32, #tpu.memory_space<vmem>>, vector<8x128xf32>
    tpu.vector_store %arg6[%c0_77, %c256], %114 {strides = array<i32>} : memref<8x512xf32, #tpu.memory_space<vmem>>, vector<8x128xf32>,
    %c0_78 = arith.constant 0 : index
    %c384 = arith.constant 384 : index
    %123 = vector.load %arg6[%c0_78, %c384] : memref<8x512xf32, #tpu.memory_space<vmem>>, vector<8x128xf32>
    tpu.vector_store %arg6[%c0_78, %c384], %119 {strides = array<i32>} : memref<8x512xf32, #tpu.memory_space<vmem>>, vector<8x128xf32>,
    return
  }
  func.func @transform_0(%arg0: i32, %arg1: i32) -> (i32, i32, i32, i32) {
    %c0_i32 = arith.constant 0 : i32
    %c0_i32_0 = arith.constant 0 : i32
    %c0_i32_1 = arith.constant 0 : i32
    %c0_i32_2 = arith.constant 0 : i32
    return %arg0, %c0_i32, %c0_i32_0, %c0_i32_1 : i32, i32, i32, i32
  }
  func.func @transform_1(%arg0: i32, %arg1: i32) -> (i32, i32, i32, i32) {
    %c0_i32 = arith.constant 0 : i32
    %c0_i32_0 = arith.constant 0 : i32
    %c0_i32_1 = arith.constant 0 : i32
    %c0_i32_2 = arith.constant 0 : i32
    return %arg0, %c0_i32, %c0_i32_0, %c0_i32_1 : i32, i32, i32, i32
  }
  func.func @transform_2(%arg0: i32, %arg1: i32) -> (i32, i32, i32, i32) {
    %c0_i32 = arith.constant 0 : i32
    %c0_i32_0 = arith.constant 0 : i32
    %c0_i32_1 = arith.constant 0 : i32
    return %arg1, %arg0, %c0_i32, %c0_i32_0 : i32, i32, i32, i32
  }
  func.func @transform_3(%arg0: i32, %arg1: i32) -> (i32, i32, i32, i32) {
    %c0_i32 = arith.constant 0 : i32
    %c0_i32_0 = arith.constant 0 : i32
    %c0_i32_1 = arith.constant 0 : i32
    return %arg1, %arg0, %c0_i32, %c0_i32_0 : i32, i32, i32, i32
  }
  func.func @transform_4(%arg0: i32, %arg1: i32) -> (i32, i32) {
    %c0_i32 = arith.constant 0 : i32
    return %arg0, %arg1 : i32, i32
  }
}

</mosaic_0001>

<llo_original>
// kernel: s4d_forward.1
$region0: #{s4d_forward.1}
  #allocation0 [shape = 'u32[]', space=smem, size = 0x4, offset = 0x4, fixed_abs, tag = 'smem constant byte address 0x4 - core index']
  #allocation1 [shape = 'u32[144,128]{1,0:T(1,128)}', space=vmem, size = 0x12000, scoped, tag = 'internal scratch']
  %s0 = inlined_call_operand.vmem [shape: f32[16,2,32,128], index: 0, kind: input, shape index: {}]
  %s1 = inlined_call_operand.vmem [shape: f32[16,2,32,128], index: 1, kind: input, shape index: {}]
  %s2 = inlined_call_operand.vmem [shape: f32[1,16,32,1], index: 2, kind: input, shape index: {}]
  %s3 = inlined_call_operand.vmem [shape: f32[1,16,32,1], index: 3, kind: input, shape index: {}]
  %s4 = inlined_call_operand.hbm [shape: f32[16,512], index: 4, kind: output, shape index: {}]
  %s5 = sld [smem:[#allocation0]]
  $region49: #{s4d_forward.1} parent=0
    _
  %s7 = ssub.s32 1, %s5
  %s8 = scalar_select 0, %s7, %s5
  $region1: #{s4d_forward.1} parent=0
    #allocation2 [shape = 'u8[32768]{0}', space=vmem, size = 0x8000, scoped, tag = 'output window, operand 0']
    #allocation3 [shape = 's32[2]{0}', space=sflag, size = 0x8, scoped, tag = 'scoped memory for s4d_forward.1']
    %9 = vsyncpa [#allocation3], 0
    %s10 = scalar_lea.sflag [#allocation3], 1
    %11 = vsyncpa %s10, 0
    loop: start=0, step=1, limit=4
    $region2: #{s4d_forward.1} parent=1 // loop_pre_header
      _
    $region3: #{s4d_forward.1} parent=1 // loop_header
      %s13 = sphi 0, %s17
      %p14 = scmp.ge.s32.totalorder %s13, 4
      %s20 = sphi 0, %s32
      %s21 = sphi 0, %s28
      %s22 = sphi 0, %s20
      %s23 = sphi 0, %s21
      %s24 = sphi 0, %s22
      %s25 = sphi 0, %s23
      %s35 = sphi 0, %s37
      %s38 = sphi 0, %s35
      %s39 = sphi 0, %s38
      %s55 = sphi 0, %s39
      %s61 = sphi 0, %s63
      %s64 = sphi 0, %s61
      %s65 = sphi 0, %s64
      %s81 = sphi 0, %s65
      %s89 = sphi 0, %s91
      %s92 = sphi 0, %s89
      %s93 = sphi 0, %s92
      %s109 = sphi 0, %s93
      %s117 = sphi 0, %s119
      %s120 = sphi 0, %s117
      %s121 = sphi 0, %s120
      %s137 = sphi 0, %s121
      %s145 = sphi 0, %s147
      %s148 = sphi 0, %s145
      %s149 = sphi 0, %s148
      %s165 = sphi 0, %s149
    $region4: #{s4d_forward.1} parent=1 // loop_header_branch
      %16 = sbr.rel (%p14) target = $region8
    $region5: #{s4d_forward.1} parent=1 // loop_body
      %s18 = ssub.s32 %s13, 1
      %s19 = ssub.s32 %s13, 2
      %s26 = sadd.s32 1, %s21
      %p27 = scmp.ge.s32.totalorder %s26, 1
      %s28 = scalar_select %p27, 0, %s26
      %s29 = sadd.s32 1, %s20
      %s30 = scalar_select %p27, %s29, %s20
      %p31 = scmp.ge.s32.totalorder %s30, 2
      %s32 = scalar_select %p31, 0, %s30
      %s33 = ssub.s32 %s20, %s32
      %p34 = scmp.eq.s32.totalorder %s33, 0
      %s36 = sadd.s32 %s35, 1
      %s37 = scalar_select %p34, %s35, %s36
      %p40 = pneg %p34
      %p41 = scmp.eq.s32.totalorder %s13, 1
      %p42 = por %p40, %p41
      %p43 = scmp.ne.s32.totalorder %s35, %s38
      %p44 = scmp.eq.s32.totalorder %s13, 0
      %p45 = por %p43, %p44
      %p46 = scmp.ne.s32.totalorder %s35, %s38
      %p47 = scmp.eq.s32.totalorder %s18, 1
      %p48 = por %p46, %p47
      %p49 = scmp.ne.s32.totalorder %s38, %s39
      %p50 = scmp.eq.s32.totalorder %s18, 0
      %p51 = por %p49, %p50
      %p52 = scmp.ne.s32.totalorder %s38, %s39
      %p53 = scmp.eq.s32.totalorder %s19, 1
      %p54 = por %p52, %p53
      %p56 = scmp.ne.s32.totalorder %s39, %s55
      %p57 = scmp.eq.s32.totalorder %s19, 0
      %p58 = por %p56, %p57
      %s59 = ssub.s32 %s20, %s32
      %p60 = scmp.eq.s32.totalorder %s59, 0
      %s62 = sadd.s32 %s61, 1
      %s63 = scalar_select %p60, %s61, %s62
      %p66 = pneg %p60
      %p67 = scmp.eq.s32.totalorder %s13, 1
      %p68 = por %p66, %p67
      %p69 = scmp.ne.s32.totalorder %s61, %s64
      %p70 = scmp.eq.s32.totalorder %s13, 0
      %p71 = por %p69, %p70
      %p72 = scmp.ne.s32.totalorder %s61, %s64
      %p73 = scmp.eq.s32.totalorder %s18, 1
      %p74 = por %p72, %p73
      %p75 = scmp.ne.s32.totalorder %s64, %s65
      %p76 = scmp.eq.s32.totalorder %s18, 0
      %p77 = por %p75, %p76
      %p78 = scmp.ne.s32.totalorder %s64, %s65
      %p79 = scmp.eq.s32.totalorder %s19, 1
      %p80 = por %p78, %p79
      %p82 = scmp.ne.s32.totalorder %s65, %s81
      %p83 = scmp.eq.s32.totalorder %s19, 0
      %p84 = por %p82, %p83
      %s85 = ssub.s32 %s21, %s28
      %s86 = ssub.s32 %s20, %s32
      %s87 = sor.u32 %s85, %s86
      %p88 = scmp.eq.s32.totalorder %s87, 0
      %s90 = sadd.s32 %s89, 1
      %s91 = scalar_select %p88, %s89, %s90
      %p94 = pneg %p88
      %p95 = scmp.eq.s32.totalorder %s13, 1
      %p96 = por %p94, %p95
      %p97 = scmp.ne.s32.totalorder %s89, %s92
      %p98 = scmp.eq.s32.totalorder %s13, 0
      %p99 = por %p97, %p98
      %p100 = scmp.ne.s32.totalorder %s89, %s92
      %p101 = scmp.eq.s32.totalorder %s18, 1
      %p102 = por %p100, %p101
      %p103 = scmp.ne.s32.totalorder %s92, %s93
      %p104 = scmp.eq.s32.totalorder %s18, 0
      %p105 = por %p103, %p104
      %p106 = scmp.ne.s32.totalorder %s92, %s93
      %p107 = scmp.eq.s32.totalorder %s19, 1
      %p108 = por %p106, %p107
      %p110 = scmp.ne.s32.totalorder %s93, %s109
      %p111 = scmp.eq.s32.totalorder %s19, 0
      %p112 = por %p110, %p111
      %s113 = ssub.s32 %s21, %s28
      %s114 = ssub.s32 %s20, %s32
      %s115 = sor.u32 %s113, %s114
      %p116 = scmp.eq.s32.totalorder %s115, 0
      %s118 = sadd.s32 %s117, 1
      %s119 = scalar_select %p116, %s117, %s118
      %p122 = pneg %p116
      %p123 = scmp.eq.s32.totalorder %s13, 1
      %p124 = por %p122, %p123
      %p125 = scmp.ne.s32.totalorder %s117, %s120
      %p126 = scmp.eq.s32.totalorder %s13, 0
      %p127 = por %p125, %p126
      %p128 = scmp.ne.s32.totalorder %s117, %s120
      %p129 = scmp.eq.s32.totalorder %s18, 1
      %p130 = por %p128, %p129
      %p131 = scmp.ne.s32.totalorder %s120, %s121
      %p132 = scmp.eq.s32.totalorder %s18, 0
      %p133 = por %p131, %p132
      %p134 = scmp.ne.s32.totalorder %s120, %s121
      %p135 = scmp.eq.s32.totalorder %s19, 1
      %p136 = por %p134, %p135
      %p138 = scmp.ne.s32.totalorder %s121, %s137
      %p139 = scmp.eq.s32.totalorder %s19, 0
      %p140 = por %p138, %p139
      %s141 = ssub.s32 %s20, %s32
      %s142 = ssub.s32 %s21, %s28
      %s143 = sor.u32 %s141, %s142
      %p144 = scmp.eq.s32.totalorder %s143, 0
      %s146 = sadd.s32 %s145, 1
      %s147 = scalar_select %p144, %s145, %s146
      %p150 = pneg %p144
      %p151 = scmp.eq.s32.totalorder %s13, 1
      %p152 = por %p150, %p151
      %p153 = scmp.ne.s32.totalorder %s145, %s148
      %p154 = scmp.eq.s32.totalorder %s13, 0
      %p155 = por %p153, %p154
      %p156 = scmp.ne.s32.totalorder %s145, %s148
      %p157 = scmp.eq.s32.totalorder %s18, 1
      %p158 = por %p156, %p157
      %p159 = scmp.ne.s32.totalorder %s148, %s149
      %p160 = scmp.eq.s32.totalorder %s18, 0
      %p161 = por %p159, %p160
      %p162 = scmp.ne.s32.totalorder %s148, %s149
      %p163 = scmp.eq.s32.totalorder %s19, 1
      %p164 = por %p162, %p163
      %p166 = scmp.ne.s32.totalorder %s149, %s165
      %p167 = scmp.eq.s32.totalorder %s19, 0
      %p168 = por %p166, %p167
      %p169 = scmp.le.s32.totalorder 1, %s13
      %p170 = scmp.lt.s32.totalorder %s13, 3
      %p171 = pnand %p169, %p170
      %p172 = pneg %p171
      // Predicated region
      $region9: #{s4d_forward.1} parent=5 // pred_check
        _
      $region10: #{s4d_forward.1} parent=5 // pred_check_branch
        %174 = sbr.rel (%p171) target = $region12
      $region11: #{s4d_forward.1} parent=5 // pred_region
        %s175 = ssub.s32 %s13, 1
      $region12: #{s4d_forward.1} parent=5 // pred_fallthru
        _
      %p176 = scmp.lt.s32.totalorder %s13, 2
      // Predicated region
      $region13: #{s4d_forward.1} parent=5 // pred_check
        %p177 = pneg %p176
      $region14: #{s4d_forward.1} parent=5 // pred_check_branch
        %179 = sbr.rel (%p177) target = $region16
      $region15: #{s4d_forward.1} parent=5 // pred_region
        // Predicated region
        $region17: #{s4d_forward.1} parent=15 // pred_check
          %p180 = pneg %p45
        $region18: #{s4d_forward.1} parent=15 // pred_check_branch
          %182 = sbr.rel (%p180) target = $region20
        $region19: #{s4d_forward.1} parent=15 // pred_region
          %s183 = smul.u32 8, %s20
          %p184 = scmp.lt.s32.totalorder %s183, 15
          %s185 = scalar_select %p184, %s183, 15
          %s186 = smul.addr %s185, 8
          %s187 = smul.addr %s186, 8
          %s188 = scalar_lea.vmem %s0, %s187
          %s189 = smul.u32 8, %s20
        $region20: #{s4d_forward.1} parent=15 // pred_fallthru
          _
        // Predicated region
        $region21: #{s4d_forward.1} parent=15 // pred_check
          %p190 = pneg %p71
        $region22: #{s4d_forward.1} parent=15 // pred_check_branch
          %192 = sbr.rel (%p190) target = $region24
        $region23: #{s4d_forward.1} parent=15 // pred_region
          %s193 = smul.u32 8, %s20
          %p194 = scmp.lt.s32.totalorder %s193, 15
          %s195 = scalar_select %p194, %s193, 15
          %s196 = smul.addr %s195, 8
          %s197 = smul.addr %s196, 8
          %s198 = scalar_lea.vmem %s1, %s197
          %s199 = smul.u32 8, %s20
        $region24: #{s4d_forward.1} parent=15 // pred_fallthru
          _
        // Predicated region
        $region25: #{s4d_forward.1} parent=15 // pred_check
          %p200 = pneg %p99
        $region26: #{s4d_forward.1} parent=15 // pred_check_branch
          %202 = sbr.rel (%p200) target = $region28
        $region27: #{s4d_forward.1} parent=15 // pred_region
          %s203 = smul.u32 8, %s20
          %p204 = scmp.lt.s32.totalorder %s21, 0
          %s205 = scalar_select %p204, %s21, 0
          %p206 = scmp.lt.s32.totalorder %s203, 15
          %s207 = scalar_select %p206, %s203, 15
          %s208 = smul.addr %s207, 4
          %s209 = smul.addr %s205, 64
          %s210 = sadd.s32 %s208, %s209
          %s211 = smul.addr %s210, 8
          %s212 = scalar_lea.vmem %s2, %s211
          %s213 = smul.u32 8, %s20
        $region28: #{s4d_forward.1} parent=15 // pred_fallthru
          _
        // Predicated region
        $region29: #{s4d_forward.1} parent=15 // pred_check
          %p214 = pneg %p127
        $region30: #{s4d_forward.1} parent=15 // pred_check_branch
          %216 = sbr.rel (%p214) target = $region32
        $region31: #{s4d_forward.1} parent=15 // pred_region
          %s217 = smul.u32 8, %s20
          %p218 = scmp.lt.s32.totalorder %s21, 0
          %s219 = scalar_select %p218, %s21, 0
          %p220 = scmp.lt.s32.totalorder %s217, 15
          %s221 = scalar_select %p220, %s217, 15
          %s222 = smul.addr %s221, 4
          %s223 = smul.addr %s219, 64
          %s224 = sadd.s32 %s222, %s223
          %s225 = smul.addr %s224, 8
          %s226 = scalar_lea.vmem %s3, %s225
          %s227 = smul.u32 8, %s20
        $region32: #{s4d_forward.1} parent=15 // pred_fallthru
          _
      $region16: #{s4d_forward.1} parent=5 // pred_fallthru
        _
      %p228 = scmp.le.s32.totalorder 1, %s13
      %p229 = scmp.lt.s32.totalorder %s13, 3
      %p230 = pnand %p228, %p229
      %p231 = pneg %p230
      // Predicated region
      $region33: #{s4d_forward.1} parent=5 // pred_check
        _
      $region34: #{s4d_forward.1} parent=5 // pred_check_branch
        %233 = sbr.rel (%p230) target = $region36
      $region35: #{s4d_forward.1} parent=5 // pred_region
        %s234 = ssub.s32 %s13, 1
        %s235 = smul.u32 8, %s22
        %p236 = scmp.lt.s32.totalorder %s235, 15
        %s237 = scalar_select %p236, %s235, 15
        %s238 = smul.addr %s237, 8
        %s239 = smul.addr %s238, 8
        %s240 = scalar_lea.vmem %s0, %s239
        %p241 = pneg %p51
        %p242 = pneg %p48
        %s243 = smul.u32 8, %s22
        %p244 = scmp.lt.s32.totalorder %s243, 15
        %s245 = scalar_select %p244, %s243, 15
        %s246 = smul.addr %s245, 8
        %s247 = smul.addr %s246, 8
        %s248 = scalar_lea.vmem %s1, %s247
        %p249 = pneg %p77
        %p250 = pneg %p74
        %s251 = smul.u32 8, %s22
        %p252 = scmp.lt.s32.totalorder %s23, 0
        %s253 = scalar_select %p252, %s23, 0
        %p254 = scmp.lt.s32.totalorder %s251, 15
        %s255 = scalar_select %p254, %s251, 15
        %s256 = smul.addr %s255, 4
        %s257 = smul.addr %s253, 64
        %s258 = sadd.s32 %s256, %s257
        %s259 = smul.addr %s258, 8
        %s260 = scalar_lea.vmem %s2, %s259
        %p261 = pneg %p105
        %p262 = pneg %p102
        %s263 = smul.u32 8, %s22
        %p264 = scmp.lt.s32.totalorder %s23, 0
        %s265 = scalar_select %p264, %s23, 0
        %p266 = scmp.lt.s32.totalorder %s263, 15
        %s267 = scalar_select %p266, %s263, 15
        %s268 = smul.addr %s267, 4
        %s269 = smul.addr %s265, 64
        %s270 = sadd.s32 %s268, %s269
        %s271 = smul.addr %s270, 8
        %s272 = scalar_lea.vmem %s3, %s271
        %p273 = pneg %p133
        %p274 = pneg %p130
        %p275 = pneg %p161
        %p276 = pneg %p158
        %s277 = sand.u32 %s148, 1
        %s278 = scalar_lea.sflag [#allocation3], %s277
        %s279 = sand.u32 %s148, 1
        %s280 = smul.addr %s279, 32
        %s281 = scalar_lea.vmem [#allocation2], %s280
        %s282 = smul.u32 8, %s22
        %p283 = scmp.lt.s32.totalorder %s282, 15
        %s284 = scalar_select %p283, %s282, 15
        %s285 = smul.addr %s284, 8
        %s286 = smul.addr %s285, 8
        %s287 = scalar_lea.vmem %s0, %s286
        %s288 = smul.u32 8, %s22
        %s289 = smul.u32 8, %s22
        %p290 = scmp.lt.s32.totalorder %s289, 15
        %s291 = scalar_select %p290, %s289, 15
        %s292 = smul.addr %s291, 8
        %s293 = smul.addr %s292, 8
        %s294 = scalar_lea.vmem %s1, %s293
        %s295 = smul.u32 8, %s22
        %s296 = smul.u32 8, %s22
        %p297 = scmp.lt.s32.totalorder %s23, 0
        %s298 = scalar_select %p297, %s23, 0
        %p299 = scmp.lt.s32.totalorder %s296, 15
        %s300 = scalar_select %p299, %s296, 15
        %s301 = smul.addr %s300, 4
        %s302 = smul.addr %s298, 64
        %s303 = sadd.s32 %s301, %s302
        %s304 = smul.addr %s303, 8
        %s305 = scalar_lea.vmem %s2, %s304
        %s306 = smul.u32 8, %s22
        %s307 = smul.u32 8, %s22
        %p308 = scmp.lt.s32.totalorder %s23, 0
        %s309 = scalar_select %p308, %s23, 0
        %p310 = scmp.lt.s32.totalorder %s307, 15
        %s311 = scalar_select %p310, %s307, 15
        %s312 = smul.addr %s311, 4
        %s313 = smul.addr %s309, 64
        %s314 = sadd.s32 %s312, %s313
        %s315 = smul.addr %s314, 8
        %s316 = scalar_lea.vmem %s3, %s315
        %s317 = smul.u32 8, %s22
        %s318 = smul.u32 4, %s23
        %v319 = vld [vmem:[%s287] sm:$0xff]
        %v320 = vld [vmem:[%s287 + $0x40] sm:$0xff]
        %v321 = vld [vmem:[%s287 + $0x80] sm:$0xff]
        %v322 = vld [vmem:[%s287 + $0xc0] sm:$0xff]
        %v323 = vld [vmem:[%s287 + $0x100] sm:$0xff]
        %v324 = vld [vmem:[%s287 + $0x140] sm:$0xff]
        %v325 = vld [vmem:[%s287 + $0x180] sm:$0xff]
        %v326 = vld [vmem:[%s287 + $0x1c0] sm:$0xff]
        %s327 = scalar_lea.vmem %s287, 32
        %v328 = vld [vmem:[%s327] sm:$0xff]
        %v329 = vld [vmem:[%s327 + $0x40] sm:$0xff]
        %v330 = vld [vmem:[%s327 + $0x80] sm:$0xff]
        %v331 = vld [vmem:[%s327 + $0xc0] sm:$0xff]
        %v332 = vld [vmem:[%s327 + $0x100] sm:$0xff]
        %v333 = vld [vmem:[%s327 + $0x140] sm:$0xff]
        %v334 = vld [vmem:[%s327 + $0x180] sm:$0xff]
        %v335 = vld [vmem:[%s327 + $0x1c0] sm:$0xff]
        %v336 = vld [vmem:[%s294] sm:$0xff]
        %v337 = vld [vmem:[%s294 + $0x40] sm:$0xff]
        %v338 = vld [vmem:[%s294 + $0x80] sm:$0xff]
        %v339 = vld [vmem:[%s294 + $0xc0] sm:$0xff]
        %v340 = vld [vmem:[%s294 + $0x100] sm:$0xff]
        %v341 = vld [vmem:[%s294 + $0x140] sm:$0xff]
        %v342 = vld [vmem:[%s294 + $0x180] sm:$0xff]
        %v343 = vld [vmem:[%s294 + $0x1c0] sm:$0xff]
        %s344 = scalar_lea.vmem %s294, 32
        %v345 = vld [vmem:[%s344] sm:$0xff]
        %v346 = vld [vmem:[%s344 + $0x40] sm:$0xff]
        %v347 = vld [vmem:[%s344 + $0x80] sm:$0xff]
        %v348 = vld [vmem:[%s344 + $0xc0] sm:$0xff]
        %v349 = vld [vmem:[%s344 + $0x100] sm:$0xff]
        %v350 = vld [vmem:[%s344 + $0x140] sm:$0xff]
        %v351 = vld [vmem:[%s344 + $0x180] sm:$0xff]
        %v352 = vld [vmem:[%s344 + $0x1c0] sm:$0xff]
        %v353 = vrot.slane %v319, 4
        %v354 = vadd.f32 %v319, %v353
        %v355 = vrot.slane %v354, 2
        %v356 = vadd.f32 %v354, %v355
        %v357 = vrot.slane %v356, 1
        %v358 = vadd.f32 %v356, %v357
        %v359 = vrot.slane %v320, 4
        %v360 = vadd.f32 %v320, %v359
        %v361 = vrot.slane %v360, 2
        %v362 = vadd.f32 %v360, %v361
        %v363 = vrot.slane %v362, 1
        %v364 = vadd.f32 %v362, %v363
        %v365 = vrot.slane %v321, 4
        %v366 = vadd.f32 %v321, %v365
        %v367 = vrot.slane %v366, 2
        %v368 = vadd.f32 %v366, %v367
        %v369 = vrot.slane %v368, 1
        %v370 = vadd.f32 %v368, %v369
        %v371 = vrot.slane %v322, 4
        %v372 = vadd.f32 %v322, %v371
        %v373 = vrot.slane %v372, 2
        %v374 = vadd.f32 %v372, %v373
        %v375 = vrot.slane %v374, 1
        %v376 = vadd.f32 %v374, %v375
        %v377 = vrot.slane %v323, 4
        %v378 = vadd.f32 %v323, %v377
        %v379 = vrot.slane %v378, 2
        %v380 = vadd.f32 %v378, %v379
        %v381 = vrot.slane %v380, 1
        %v382 = vadd.f32 %v380, %v381
        %v383 = vrot.slane %v324, 4
        %v384 = vadd.f32 %v324, %v383
        %v385 = vrot.slane %v384, 2
        %v386 = vadd.f32 %v384, %v385
        %v387 = vrot.slane %v386, 1
        %v388 = vadd.f32 %v386, %v387
        %v389 = vrot.slane %v325, 4
        %v390 = vadd.f32 %v325, %v389
        %v391 = vrot.slane %v390, 2
        %v392 = vadd.f32 %v390, %v391
        %v393 = vrot.slane %v392, 1
        %v394 = vadd.f32 %v392, %v393
        %v395 = vrot.slane %v326, 4
        %v396 = vadd.f32 %v326, %v395
        %v397 = vrot.slane %v396, 2
        %v398 = vadd.f32 %v396, %v397
        %v399 = vrot.slane %v398, 1
        %v400 = vadd.f32 %v398, %v399
        %v401 = vmul.f32 %v319, %v336
        %v402 = vmul.f32 %v320, %v337
        %v403 = vmul.f32 %v321, %v338
        %v404 = vmul.f32 %v322, %v339
        %v405 = vmul.f32 %v323, %v340
        %v406 = vmul.f32 %v324, %v341
        %v407 = vmul.f32 %v325, %v342
        %v408 = vmul.f32 %v326, %v343
        %v409 = vmul.f32 %v328, %v345
        %v410 = vmul.f32 %v329, %v346
        %v411 = vmul.f32 %v330, %v347
        %v412 = vmul.f32 %v331, %v348
        %v413 = vmul.f32 %v332, %v349
        %v414 = vmul.f32 %v333, %v350
        %v415 = vmul.f32 %v334, %v351
        %v416 = vmul.f32 %v335, %v352
        %v417 = vsub.f32 %v401, %v409
        %v418 = vsub.f32 %v402, %v410
        %v419 = vsub.f32 %v403, %v411
        %v420 = vsub.f32 %v404, %v412
        %v421 = vsub.f32 %v405, %v413
        %v422 = vsub.f32 %v406, %v414
        %v423 = vsub.f32 %v407, %v415
        %v424 = vsub.f32 %v408, %v416
        %v425 = vmul.f32 %v319, %v345
        %v426 = vmul.f32 %v320, %v346
        %v427 = vmul.f32 %v321, %v347
        %v428 = vmul.f32 %v322, %v348
        %v429 = vmul.f32 %v323, %v349
        %v430 = vmul.f32 %v324, %v350
        %v431 = vmul.f32 %v325, %v351
        %v432 = vmul.f32 %v326, %v352
        %v433 = vmul.f32 %v328, %v336
        %v434 = vmul.f32 %v329, %v337
        %v435 = vmul.f32 %v330, %v338
        %v436 = vmul.f32 %v331, %v339
        %v437 = vmul.f32 %v332, %v340
        %v438 = vmul.f32 %v333, %v341
        %v439 = vmul.f32 %v334, %v342
        %v440 = vmul.f32 %v335, %v343
        %v441 = vadd.f32 %v425, %v433
        %v442 = vadd.f32 %v426, %v434
        %v443 = vadd.f32 %v427, %v435
        %v444 = vadd.f32 %v428, %v436
        %v445 = vadd.f32 %v429, %v437
        %v446 = vadd.f32 %v430, %v438
        %v447 = vadd.f32 %v431, %v439
        %v448 = vadd.f32 %v432, %v440
        %v449 = vrot.slane %v417, 4
        %v450 = vadd.f32 %v417, %v449
        %v451 = vrot.slane %v450, 2
        %v452 = vadd.f32 %v450, %v451
        %v453 = vrot.slane %v452, 1
        %v454 = vadd.f32 %v452, %v453
        %v455 = vrot.slane %v418, 4
        %v456 = vadd.f32 %v418, %v455
        %v457 = vrot.slane %v456, 2
        %v458 = vadd.f32 %v456, %v457
        %v459 = vrot.slane %v458, 1
        %v460 = vadd.f32 %v458, %v459
        %v461 = vrot.slane %v419, 4
        %v462 = vadd.f32 %v419, %v461
        %v463 = vrot.slane %v462, 2
        %v464 = vadd.f32 %v462, %v463
        %v465 = vrot.slane %v464, 1
        %v466 = vadd.f32 %v464, %v465
        %v467 = vrot.slane %v420, 4
        %v468 = vadd.f32 %v420, %v467
        %v469 = vrot.slane %v468, 2
        %v470 = vadd.f32 %v468, %v469
        %v471 = vrot.slane %v470, 1
        %v472 = vadd.f32 %v470, %v471
        %v473 = vrot.slane %v421, 4
        %v474 = vadd.f32 %v421, %v473
        %v475 = vrot.slane %v474, 2
        %v476 = vadd.f32 %v474, %v475
        %v477 = vrot.slane %v476, 1
        %v478 = vadd.f32 %v476, %v477
        %v479 = vrot.slane %v422, 4
        %v480 = vadd.f32 %v422, %v479
        %v481 = vrot.slane %v480, 2
        %v482 = vadd.f32 %v480, %v481
        %v483 = vrot.slane %v482, 1
        %v484 = vadd.f32 %v482, %v483
        %v485 = vrot.slane %v423, 4
        %v486 = vadd.f32 %v423, %v485
        %v487 = vrot.slane %v486, 2
        %v488 = vadd.f32 %v486, %v487
        %v489 = vrot.slane %v488, 1
        %v490 = vadd.f32 %v488, %v489
        %v491 = vrot.slane %v424, 4
        %v492 = vadd.f32 %v424, %v491
        %v493 = vrot.slane %v492, 2
        %v494 = vadd.f32 %v492, %v493
        %v495 = vrot.slane %v494, 1
        %v496 = vadd.f32 %v494, %v495
        %v497 = vmul.f32 %v417, %v336
        %v498 = vmul.f32 %v418, %v337
        %v499 = vmul.f32 %v419, %v338
        %v500 = vmul.f32 %v420, %v339
        %v501 = vmul.f32 %v421, %v340
        %v502 = vmul.f32 %v422, %v341
        %v503 = vmul.f32 %v423, %v342
        %v504 = vmul.f32 %v424, %v343
        %v505 = vmul.f32 %v441, %v345
        %v506 = vmul.f32 %v442, %v346
        %v507 = vmul.f32 %v443, %v347
        %v508 = vmul.f32 %v444, %v348
        %v509 = vmul.f32 %v445, %v349
        %v510 = vmul.f32 %v446, %v350
        %v511 = vmul.f32 %v447, %v351
        %v512 = vmul.f32 %v448, %v352
        %v513 = vsub.f32 %v497, %v505
        %v514 = vsub.f32 %v498, %v506
        %v515 = vsub.f32 %v499, %v507
        %v516 = vsub.f32 %v500, %v508
        %v517 = vsub.f32 %v501, %v509
        %v518 = vsub.f32 %v502, %v510
        %v519 = vsub.f32 %v503, %v511
        %v520 = vsub.f32 %v504, %v512
        %v521 = vmul.f32 %v417, %v345
        %v522 = vmul.f32 %v418, %v346
        %v523 = vmul.f32 %v419, %v347
        %v524 = vmul.f32 %v420, %v348
        %v525 = vmul.f32 %v421, %v349
        %v526 = vmul.f32 %v422, %v350
        %v527 = vmul.f32 %v423, %v351
        %v528 = vmul.f32 %v424, %v352
        %v529 = vmul.f32 %v441, %v336
        %v530 = vmul.f32 %v442, %v337
        %v531 = vmul.f32 %v443, %v338
        %v532 = vmul.f32 %v444, %v339
        %v533 = vmul.f32 %v445, %v340
        %v534 = vmul.f32 %v446, %v341
        %v535 = vmul.f32 %v447, %v342
        %v536 = vmul.f32 %v448, %v343
        %v537 = vadd.f32 %v521, %v529
        %v538 = vadd.f32 %v522, %v530
        %v539 = vadd.f32 %v523, %v531
        %v540 = vadd.f32 %v524, %v532
        %v541 = vadd.f32 %v525, %v533
        %v542 = vadd.f32 %v526, %v534
        %v543 = vadd.f32 %v527, %v535
        %v544 = vadd.f32 %v528, %v536
        %v545 = vrot.slane %v513, 4
        %v546 = vadd.f32 %v513, %v545
        %v547 = vrot.slane %v546, 2
        %v548 = vadd.f32 %v546, %v547
        %v549 = vrot.slane %v548, 1
        %v550 = vadd.f32 %v548, %v549
        %v551 = vrot.slane %v514, 4
        %v552 = vadd.f32 %v514, %v551
        %v553 = vrot.slane %v552, 2
        %v554 = vadd.f32 %v552, %v553
        %v555 = vrot.slane %v554, 1
        %v556 = vadd.f32 %v554, %v555
        %v557 = vrot.slane %v515, 4
        %v558 = vadd.f32 %v515, %v557
        %v559 = vrot.slane %v558, 2
        %v560 = vadd.f32 %v558, %v559
        %v561 = vrot.slane %v560, 1
        %v562 = vadd.f32 %v560, %v561
        %v563 = vrot.slane %v516, 4
        %v564 = vadd.f32 %v516, %v563
        %v565 = vrot.slane %v564, 2
        %v566 = vadd.f32 %v564, %v565
        %v567 = vrot.slane %v566, 1
        %v568 = vadd.f32 %v566, %v567
        %v569 = vrot.slane %v517, 4
        %v570 = vadd.f32 %v517, %v569
        %v571 = vrot.slane %v570, 2
        %v572 = vadd.f32 %v570, %v571
        %v573 = vrot.slane %v572, 1
        %v574 = vadd.f32 %v572, %v573
        %v575 = vrot.slane %v518, 4
        %v576 = vadd.f32 %v518, %v575
        %v577 = vrot.slane %v576, 2
        %v578 = vadd.f32 %v576, %v577
        %v579 = vrot.slane %v578, 1
        %v580 = vadd.f32 %v578, %v579
        %v581 = vrot.slane %v519, 4
        %v582 = vadd.f32 %v519, %v581
        %v583 = vrot.slane %v582, 2
        %v584 = vadd.f32 %v582, %v583
        %v585 = vrot.slane %v584, 1
        %v586 = vadd.f32 %v584, %v585
        %v587 = vrot.slane %v520, 4
        %v588 = vadd.f32 %v520, %v587
        %v589 = vrot.slane %v588, 2
        %v590 = vadd.f32 %v588, %v589
        %v591 = vrot.slane %v590, 1
        %v592 = vadd.f32 %v590, %v591
        %v593 = vmul.f32 %v513, %v336
        %v594 = vmul.f32 %v514, %v337
        %v595 = vmul.f32 %v515, %v338
        %v596 = vmul.f32 %v516, %v339
        %v597 = vmul.f32 %v517, %v340
        %v598 = vmul.f32 %v518, %v341
        %v599 = vmul.f32 %v519, %v342
        %v600 = vmul.f32 %v520, %v343
        %v601 = vmul.f32 %v537, %v345
        %v602 = vmul.f32 %v538, %v346
        %v603 = vmul.f32 %v539, %v347
        %v604 = vmul.f32 %v540, %v348
        %v605 = vmul.f32 %v541, %v349
        %v606 = vmul.f32 %v542, %v350
        %v607 = vmul.f32 %v543, %v351
        %v608 = vmul.f32 %v544, %v352
        %v609 = vsub.f32 %v593, %v601
        %v610 = vsub.f32 %v594, %v602
        %v611 = vsub.f32 %v595, %v603
        %v612 = vsub.f32 %v596, %v604
        %v613 = vsub.f32 %v597, %v605
        %v614 = vsub.f32 %v598, %v606
        %v615 = vsub.f32 %v599, %v607
        %v616 = vsub.f32 %v600, %v608
        %v617 = vrot.slane %v609, 4
        %v618 = vadd.f32 %v609, %v617
        %v619 = vrot.slane %v618, 2
        %v620 = vadd.f32 %v618, %v619
        %v621 = vrot.slane %v620, 1
        %v622 = vadd.f32 %v620, %v621
        %v623 = vrot.slane %v610, 4
        %v624 = vadd.f32 %v610, %v623
        %v625 = vrot.slane %v624, 2
        %v626 = vadd.f32 %v624, %v625
        %v627 = vrot.slane %v626, 1
        %v628 = vadd.f32 %v626, %v627
        %v629 = vrot.slane %v611, 4
        %v630 = vadd.f32 %v611, %v629
        %v631 = vrot.slane %v630, 2
        %v632 = vadd.f32 %v630, %v631
        %v633 = vrot.slane %v632, 1
        %v634 = vadd.f32 %v632, %v633
        %v635 = vrot.slane %v612, 4
        %v636 = vadd.f32 %v612, %v635
        %v637 = vrot.slane %v636, 2
        %v638 = vadd.f32 %v636, %v637
        %v639 = vrot.slane %v638, 1
        %v640 = vadd.f32 %v638, %v639
        %v641 = vrot.slane %v613, 4
        %v642 = vadd.f32 %v613, %v641
        %v643 = vrot.slane %v642, 2
        %v644 = vadd.f32 %v642, %v643
        %v645 = vrot.slane %v644, 1
        %v646 = vadd.f32 %v644, %v645
        %v647 = vrot.slane %v614, 4
        %v648 = vadd.f32 %v614, %v647
        %v649 = vrot.slane %v648, 2
        %v650 = vadd.f32 %v648, %v649
        %v651 = vrot.slane %v650, 1
        %v652 = vadd.f32 %v650, %v651
        %v653 = vrot.slane %v615, 4
        %v654 = vadd.f32 %v615, %v653
        %v655 = vrot.slane %v654, 2
        %v656 = vadd.f32 %v654, %v655
        %v657 = vrot.slane %v656, 1
        %v658 = vadd.f32 %v656, %v657
        %v659 = vrot.slane %v616, 4
        %v660 = vadd.f32 %v616, %v659
        %v661 = vrot.slane %v660, 2
        %v662 = vadd.f32 %v660, %v661
        %v663 = vrot.slane %v662, 1
        %v664 = vadd.f32 %v662, %v663
        %v665 = vld [vmem:[%s287 + $0x8] sm:$0xff]
        %v666 = vld [vmem:[%s287 + $0x48] sm:$0xff]
        %v667 = vld [vmem:[%s287 + $0x88] sm:$0xff]
        %v668 = vld [vmem:[%s287 + $0xc8] sm:$0xff]
        %v669 = vld [vmem:[%s287 + $0x108] sm:$0xff]
        %v670 = vld [vmem:[%s287 + $0x148] sm:$0xff]
        %v671 = vld [vmem:[%s287 + $0x188] sm:$0xff]
        %v672 = vld [vmem:[%s287 + $0x1c8] sm:$0xff]
        %v673 = vld [vmem:[%s327 + $0x8] sm:$0xff]
        %v674 = vld [vmem:[%s327 + $0x48] sm:$0xff]
        %v675 = vld [vmem:[%s327 + $0x88] sm:$0xff]
        %v676 = vld [vmem:[%s327 + $0xc8] sm:$0xff]
        %v677 = vld [vmem:[%s327 + $0x108] sm:$0xff]
        %v678 = vld [vmem:[%s327 + $0x148] sm:$0xff]
        %v679 = vld [vmem:[%s327 + $0x188] sm:$0xff]
        %v680 = vld [vmem:[%s327 + $0x1c8] sm:$0xff]
        %v681 = vld [vmem:[%s294 + $0x8] sm:$0xff]
        %v682 = vld [vmem:[%s294 + $0x48] sm:$0xff]
        %v683 = vld [vmem:[%s294 + $0x88] sm:$0xff]
        %v684 = vld [vmem:[%s294 + $0xc8] sm:$0xff]
        %v685 = vld [vmem:[%s294 + $0x108] sm:$0xff]
        %v686 = vld [vmem:[%s294 + $0x148] sm:$0xff]
        %v687 = vld [vmem:[%s294 + $0x188] sm:$0xff]
        %v688 = vld [vmem:[%s294 + $0x1c8] sm:$0xff]
        %v689 = vld [vmem:[%s344 + $0x8] sm:$0xff]
        %v690 = vld [vmem:[%s344 + $0x48] sm:$0xff]
        %v691 = vld [vmem:[%s344 + $0x88] sm:$0xff]
        %v692 = vld [vmem:[%s344 + $0xc8] sm:$0xff]
        %v693 = vld [vmem:[%s344 + $0x108] sm:$0xff]
        %v694 = vld [vmem:[%s344 + $0x148] sm:$0xff]
        %v695 = vld [vmem:[%s344 + $0x188] sm:$0xff]
        %v696 = vld [vmem:[%s344 + $0x1c8] sm:$0xff]
        %v697 = vrot.slane %v665, 4
        %v698 = vadd.f32 %v665, %v697
        %v699 = vrot.slane %v698, 2
        %v700 = vadd.f32 %v698, %v699
        %v701 = vrot.slane %v700, 1
        %v702 = vadd.f32 %v700, %v701
        %v703 = vrot.slane %v666, 4
        %v704 = vadd.f32 %v666, %v703
        %v705 = vrot.slane %v704, 2
        %v706 = vadd.f32 %v704, %v705
        %v707 = vrot.slane %v706, 1
        %v708 = vadd.f32 %v706, %v707
        %v709 = vrot.slane %v667, 4
        %v710 = vadd.f32 %v667, %v709
        %v711 = vrot.slane %v710, 2
        %v712 = vadd.f32 %v710, %v711
        %v713 = vrot.slane %v712, 1
        %v714 = vadd.f32 %v712, %v713
        %v715 = vrot.slane %v668, 4
        %v716 = vadd.f32 %v668, %v715
        %v717 = vrot.slane %v716, 2
        %v718 = vadd.f32 %v716, %v717
        %v719 = vrot.slane %v718, 1
        %v720 = vadd.f32 %v718, %v719
        %v721 = vrot.slane %v669, 4
        %v722 = vadd.f32 %v669, %v721
        %v723 = vrot.slane %v722, 2
        %v724 = vadd.f32 %v722, %v723
        %v725 = vrot.slane %v724, 1
        %v726 = vadd.f32 %v724, %v725
        %v727 = vrot.slane %v670, 4
        %v728 = vadd.f32 %v670, %v727
        %v729 = vrot.slane %v728, 2
        %v730 = vadd.f32 %v728, %v729
        %v731 = vrot.slane %v730, 1
        %v732 = vadd.f32 %v730, %v731
        %v733 = vrot.slane %v671, 4
        %v734 = vadd.f32 %v671, %v733
        %v735 = vrot.slane %v734, 2
        %v736 = vadd.f32 %v734, %v735
        %v737 = vrot.slane %v736, 1
        %v738 = vadd.f32 %v736, %v737
        %v739 = vrot.slane %v672, 4
        %v740 = vadd.f32 %v672, %v739
        %v741 = vrot.slane %v740, 2
        %v742 = vadd.f32 %v740, %v741
        %v743 = vrot.slane %v742, 1
        %v744 = vadd.f32 %v742, %v743
        %v745 = vadd.f32 %v358, %v702
        %v746 = vadd.f32 %v364, %v708
        %v747 = vadd.f32 %v370, %v714
        %v748 = vadd.f32 %v376, %v720
        %v749 = vadd.f32 %v382, %v726
        %v750 = vadd.f32 %v388, %v732
        %v751 = vadd.f32 %v394, %v738
        %v752 = vadd.f32 %v400, %v744
        %v753 = vmul.f32 %v665, %v681
        %v754 = vmul.f32 %v666, %v682
        %v755 = vmul.f32 %v667, %v683
        %v756 = vmul.f32 %v668, %v684
        %v757 = vmul.f32 %v669, %v685
        %v758 = vmul.f32 %v670, %v686
        %v759 = vmul.f32 %v671, %v687
        %v760 = vmul.f32 %v672, %v688
        %v761 = vmul.f32 %v673, %v689
        %v762 = vmul.f32 %v674, %v690
        %v763 = vmul.f32 %v675, %v691
        %v764 = vmul.f32 %v676, %v692
        %v765 = vmul.f32 %v677, %v693
        %v766 = vmul.f32 %v678, %v694
        %v767 = vmul.f32 %v679, %v695
        %v768 = vmul.f32 %v680, %v696
        %v769 = vsub.f32 %v753, %v761
        %v770 = vsub.f32 %v754, %v762
        %v771 = vsub.f32 %v755, %v763
        %v772 = vsub.f32 %v756, %v764
        %v773 = vsub.f32 %v757, %v765
        %v774 = vsub.f32 %v758, %v766
        %v775 = vsub.f32 %v759, %v767
        %v776 = vsub.f32 %v760, %v768
        %v777 = vmul.f32 %v665, %v689
        %v778 = vmul.f32 %v666, %v690
        %v779 = vmul.f32 %v667, %v691
        %v780 = vmul.f32 %v668, %v692
        %v781 = vmul.f32 %v669, %v693
        %v782 = vmul.f32 %v670, %v694
        %v783 = vmul.f32 %v671, %v695
        %v784 = vmul.f32 %v672, %v696
        %v785 = vmul.f32 %v673, %v681
        %v786 = vmul.f32 %v674, %v682
        %v787 = vmul.f32 %v675, %v683
        %v788 = vmul.f32 %v676, %v684
        %v789 = vmul.f32 %v677, %v685
        %v790 = vmul.f32 %v678, %v686
        %v791 = vmul.f32 %v679, %v687
        %v792 = vmul.f32 %v680, %v688
        %v793 = vadd.f32 %v777, %v785
        %v794 = vadd.f32 %v778, %v786
        %v795 = vadd.f32 %v779, %v787
        %v796 = vadd.f32 %v780, %v788
        %v797 = vadd.f32 %v781, %v789
        %v798 = vadd.f32 %v782, %v790
        %v799 = vadd.f32 %v783, %v791
        %v800 = vadd.f32 %v784, %v792
        %v801 = vrot.slane %v769, 4
        %v802 = vadd.f32 %v769, %v801
        %v803 = vrot.slane %v802, 2
        %v804 = vadd.f32 %v802, %v803
        %v805 = vrot.slane %v804, 1
        %v806 = vadd.f32 %v804, %v805
        %v807 = vrot.slane %v770, 4
        %v808 = vadd.f32 %v770, %v807
        %v809 = vrot.slane %v808, 2
        %v810 = vadd.f32 %v808, %v809
        %v811 = vrot.slane %v810, 1
        %v812 = vadd.f32 %v810, %v811
        %v813 = vrot.slane %v771, 4
        %v814 = vadd.f32 %v771, %v813
        %v815 = vrot.slane %v814, 2
        %v816 = vadd.f32 %v814, %v815
        %v817 = vrot.slane %v816, 1
        %v818 = vadd.f32 %v816, %v817
        %v819 = vrot.slane %v772, 4
        %v820 = vadd.f32 %v772, %v819
        %v821 = vrot.slane %v820, 2
        %v822 = vadd.f32 %v820, %v821
        %v823 = vrot.slane %v822, 1
        %v824 = vadd.f32 %v822, %v823
        %v825 = vrot.slane %v773, 4
        %v826 = vadd.f32 %v773, %v825
        %v827 = vrot.slane %v826, 2
        %v828 = vadd.f32 %v826, %v827
        %v829 = vrot.slane %v828, 1
        %v830 = vadd.f32 %v828, %v829
        %v831 = vrot.slane %v774, 4
        %v832 = vadd.f32 %v774, %v831
        %v833 = vrot.slane %v832, 2
        %v834 = vadd.f32 %v832, %v833
        %v835 = vrot.slane %v834, 1
        %v836 = vadd.f32 %v834, %v835
        %v837 = vrot.slane %v775, 4
        %v838 = vadd.f32 %v775, %v837
        %v839 = vrot.slane %v838, 2
        %v840 = vadd.f32 %v838, %v839
        %v841 = vrot.slane %v840, 1
        %v842 = vadd.f32 %v840, %v841
        %v843 = vrot.slane %v776, 4
        %v844 = vadd.f32 %v776, %v843
        %v845 = vrot.slane %v844, 2
        %v846 = vadd.f32 %v844, %v845
        %v847 = vrot.slane %v846, 1
        %v848 = vadd.f32 %v846, %v847
        %v849 = vadd.f32 %v454, %v806
        %v850 = vadd.f32 %v460, %v812
        %v851 = vadd.f32 %v466, %v818
        %v852 = vadd.f32 %v472, %v824
        %v853 = vadd.f32 %v478, %v830
        %v854 = vadd.f32 %v484, %v836
        %v855 = vadd.f32 %v490, %v842
        %v856 = vadd.f32 %v496, %v848
        %v857 = vmul.f32 %v769, %v681
        %v858 = vmul.f32 %v770, %v682
        %v859 = vmul.f32 %v771, %v683
        %v860 = vmul.f32 %v772, %v684
        %v861 = vmul.f32 %v773, %v685
        %v862 = vmul.f32 %v774, %v686
        %v863 = vmul.f32 %v775, %v687
        %v864 = vmul.f32 %v776, %v688
        %v865 = vmul.f32 %v793, %v689
        %v866 = vmul.f32 %v794, %v690
        %v867 = vmul.f32 %v795, %v691
        %v868 = vmul.f32 %v796, %v692
        %v869 = vmul.f32 %v797, %v693
        %v870 = vmul.f32 %v798, %v694
        %v871 = vmul.f32 %v799, %v695
        %v872 = vmul.f32 %v800, %v696
        %v873 = vsub.f32 %v857, %v865
        %v874 = vsub.f32 %v858, %v866
        %v875 = vsub.f32 %v859, %v867
        %v876 = vsub.f32 %v860, %v868
        %v877 = vsub.f32 %v861, %v869
        %v878 = vsub.f32 %v862, %v870
        %v879 = vsub.f32 %v863, %v871
        %v880 = vsub.f32 %v864, %v872
        %v881 = vmul.f32 %v769, %v689
        %v882 = vmul.f32 %v770, %v690
        %v883 = vmul.f32 %v771, %v691
        %v884 = vmul.f32 %v772, %v692
        %v885 = vmul.f32 %v773, %v693
        %v886 = vmul.f32 %v774, %v694
        %v887 = vmul.f32 %v775, %v695
        %v888 = vmul.f32 %v776, %v696
        %v889 = vmul.f32 %v793, %v681
        %v890 = vmul.f32 %v794, %v682
        %v891 = vmul.f32 %v795, %v683
        %v892 = vmul.f32 %v796, %v684
        %v893 = vmul.f32 %v797, %v685
        %v894 = vmul.f32 %v798, %v686
        %v895 = vmul.f32 %v799, %v687
        %v896 = vmul.f32 %v800, %v688
        %v897 = vadd.f32 %v881, %v889
        %v898 = vadd.f32 %v882, %v890
        %v899 = vadd.f32 %v883, %v891
        %v900 = vadd.f32 %v884, %v892
        %v901 = vadd.f32 %v885, %v893
        %v902 = vadd.f32 %v886, %v894
        %v903 = vadd.f32 %v887, %v895
        %v904 = vadd.f32 %v888, %v896
        %v905 = vrot.slane %v873, 4
        %v906 = vadd.f32 %v873, %v905
        %v907 = vrot.slane %v906, 2
        %v908 = vadd.f32 %v906, %v907
        %v909 = vrot.slane %v908, 1
        %v910 = vadd.f32 %v908, %v909
        %v911 = vrot.slane %v874, 4
        %v912 = vadd.f32 %v874, %v911
        %v913 = vrot.slane %v912, 2
        %v914 = vadd.f32 %v912, %v913
        %v915 = vrot.slane %v914, 1
        %v916 = vadd.f32 %v914, %v915
        %v917 = vrot.slane %v875, 4
        %v918 = vadd.f32 %v875, %v917
        %v919 = vrot.slane %v918, 2
        %v920 = vadd.f32 %v918, %v919
        %v921 = vrot.slane %v920, 1
        %v922 = vadd.f32 %v920, %v921
        %v923 = vrot.slane %v876, 4
        %v924 = vadd.f32 %v876, %v923
        %v925 = vrot.slane %v924, 2
        %v926 = vadd.f32 %v924, %v925
        %v927 = vrot.slane %v926, 1
        %v928 = vadd.f32 %v926, %v927
        %v929 = vrot.slane %v877, 4
        %v930 = vadd.f32 %v877, %v929
        %v931 = vrot.slane %v930, 2
        %v932 = vadd.f32 %v930, %v931
        %v933 = vrot.slane %v932, 1
        %v934 = vadd.f32 %v932, %v933
        %v935 = vrot.slane %v878, 4
        %v936 = vadd.f32 %v878, %v935
        %v937 = vrot.slane %v936, 2
        %v938 = vadd.f32 %v936, %v937
        %v939 = vrot.slane %v938, 1
        %v940 = vadd.f32 %v938, %v939
        %v941 = vrot.slane %v879, 4
        %v942 = vadd.f32 %v879, %v941
        %v943 = vrot.slane %v942, 2
        %v944 = vadd.f32 %v942, %v943
        %v945 = vrot.slane %v944, 1
        %v946 = vadd.f32 %v944, %v945
        %v947 = vrot.slane %v880, 4
        %v948 = vadd.f32 %v880, %v947
        %v949 = vrot.slane %v948, 2
        %v950 = vadd.f32 %v948, %v949
        %v951 = vrot.slane %v950, 1
        %v952 = vadd.f32 %v950, %v951
        %v953 = vadd.f32 %v550, %v910
        %v954 = vadd.f32 %v556, %v916
        %v955 = vadd.f32 %v562, %v922
        %v956 = vadd.f32 %v568, %v928
        %v957 = vadd.f32 %v574, %v934
        %v958 = vadd.f32 %v580, %v940
        %v959 = vadd.f32 %v586, %v946
        %v960 = vadd.f32 %v592, %v952
        %v961 = vmul.f32 %v873, %v681
        %v962 = vmul.f32 %v874, %v682
        %v963 = vmul.f32 %v875, %v683
        %v964 = vmul.f32 %v876, %v684
        %v965 = vmul.f32 %v877, %v685
        %v966 = vmul.f32 %v878, %v686
        %v967 = vmul.f32 %v879, %v687
        %v968 = vmul.f32 %v880, %v688
        %v969 = vmul.f32 %v897, %v689
        %v970 = vmul.f32 %v898, %v690
        %v971 = vmul.f32 %v899, %v691
        %v972 = vmul.f32 %v900, %v692
        %v973 = vmul.f32 %v901, %v693
        %v974 = vmul.f32 %v902, %v694
        %v975 = vmul.f32 %v903, %v695
        %v976 = vmul.f32 %v904, %v696
        %v977 = vsub.f32 %v961, %v969
        %v978 = vsub.f32 %v962, %v970
        %v979 = vsub.f32 %v963, %v971
        %v980 = vsub.f32 %v964, %v972
        %v981 = vsub.f32 %v965, %v973
        %v982 = vsub.f32 %v966, %v974
        %v983 = vsub.f32 %v967, %v975
        %v984 = vsub.f32 %v968, %v976
        %v985 = vrot.slane %v977, 4
        %v986 = vadd.f32 %v977, %v985
        %v987 = vrot.slane %v986, 2
        %v988 = vadd.f32 %v986, %v987
        %v989 = vrot.slane %v988, 1
        %v990 = vadd.f32 %v988, %v989
        %v991 = vrot.slane %v978, 4
        %v992 = vadd.f32 %v978, %v991
        %v993 = vrot.slane %v992, 2
        %v994 = vadd.f32 %v992, %v993
        %v995 = vrot.slane %v994, 1
        %v996 = vadd.f32 %v994, %v995
        %v997 = vrot.slane %v979, 4
        %v998 = vadd.f32 %v979, %v997
        %v999 = vrot.slane %v998, 2
        %v1000 = vadd.f32 %v998, %v999
        %v1001 = vrot.slane %v1000, 1
        %v1002 = vadd.f32 %v1000, %v1001
        %v1003 = vrot.slane %v980, 4
        %v1004 = vadd.f32 %v980, %v1003
        %v1005 = vrot.slane %v1004, 2
        %v1006 = vadd.f32 %v1004, %v1005
        %v1007 = vrot.slane %v1006, 1
        %v1008 = vadd.f32 %v1006, %v1007
        %v1009 = vrot.slane %v981, 4
        %v1010 = vadd.f32 %v981, %v1009
        %v1011 = vrot.slane %v1010, 2
        %v1012 = vadd.f32 %v1010, %v1011
        %v1013 = vrot.slane %v1012, 1
        %v1014 = vadd.f32 %v1012, %v1013
        %v1015 = vrot.slane %v982, 4
        %v1016 = vadd.f32 %v982, %v1015
        %v1017 = vrot.slane %v1016, 2
        %v1018 = vadd.f32 %v1016, %v1017
        %v1019 = vrot.slane %v1018, 1
        %v1020 = vadd.f32 %v1018, %v1019
        %v1021 = vrot.slane %v983, 4
        %v1022 = vadd.f32 %v983, %v1021
        %v1023 = vrot.slane %v1022, 2
        %v1024 = vadd.f32 %v1022, %v1023
        %v1025 = vrot.slane %v1024, 1
        %v1026 = vadd.f32 %v1024, %v1025
        %v1027 = vrot.slane %v984, 4
        %v1028 = vadd.f32 %v984, %v1027
        %v1029 = vrot.slane %v1028, 2
        %v1030 = vadd.f32 %v1028, %v1029
        %v1031 = vrot.slane %v1030, 1
        %v1032 = vadd.f32 %v1030, %v1031
        %v1033 = vadd.f32 %v622, %v990
        %v1034 = vadd.f32 %v628, %v996
        %v1035 = vadd.f32 %v634, %v1002
        %v1036 = vadd.f32 %v640, %v1008
        %v1037 = vadd.f32 %v646, %v1014
        %v1038 = vadd.f32 %v652, %v1020
        %v1039 = vadd.f32 %v658, %v1026
        %v1040 = vadd.f32 %v664, %v1032
        %v1041 = vld [vmem:[%s287 + $0x10] sm:$0xff]
        %v1042 = vld [vmem:[%s287 + $0x50] sm:$0xff]
        %v1043 = vld [vmem:[%s287 + $0x90] sm:$0xff]
        %v1044 = vld [vmem:[%s287 + $0xd0] sm:$0xff]
        %v1045 = vld [vmem:[%s287 + $0x110] sm:$0xff]
        %v1046 = vld [vmem:[%s287 + $0x150] sm:$0xff]
        %v1047 = vld [vmem:[%s287 + $0x190] sm:$0xff]
        %v1048 = vld [vmem:[%s287 + $0x1d0] sm:$0xff]
        %v1049 = vld [vmem:[%s327 + $0x10] sm:$0xff]
        %v1050 = vld [vmem:[%s327 + $0x50] sm:$0xff]
        %v1051 = vld [vmem:[%s327 + $0x90] sm:$0xff]
        %v1052 = vld [vmem:[%s327 + $0xd0] sm:$0xff]
        %v1053 = vld [vmem:[%s327 + $0x110] sm:$0xff]
        %v1054 = vld [vmem:[%s327 + $0x150] sm:$0xff]
        %v1055 = vld [vmem:[%s327 + $0x190] sm:$0xff]
        %v1056 = vld [vmem:[%s327 + $0x1d0] sm:$0xff]
        %v1057 = vld [vmem:[%s294 + $0x10] sm:$0xff]
        %v1058 = vld [vmem:[%s294 + $0x50] sm:$0xff]
        %v1059 = vld [vmem:[%s294 + $0x90] sm:$0xff]
        %v1060 = vld [vmem:[%s294 + $0xd0] sm:$0xff]
        %v1061 = vld [vmem:[%s294 + $0x110] sm:$0xff]
        %v1062 = vld [vmem:[%s294 + $0x150] sm:$0xff]
        %v1063 = vld [vmem:[%s294 + $0x190] sm:$0xff]
        %v1064 = vld [vmem:[%s294 + $0x1d0] sm:$0xff]
        %v1065 = vld [vmem:[%s344 + $0x10] sm:$0xff]
        %v1066 = vld [vmem:[%s344 + $0x50] sm:$0xff]
        %v1067 = vld [vmem:[%s344 + $0x90] sm:$0xff]
        %v1068 = vld [vmem:[%s344 + $0xd0] sm:$0xff]
        %v1069 = vld [vmem:[%s344 + $0x110] sm:$0xff]
        %v1070 = vld [vmem:[%s344 + $0x150] sm:$0xff]
        %v1071 = vld [vmem:[%s344 + $0x190] sm:$0xff]
        %v1072 = vld [vmem:[%s344 + $0x1d0] sm:$0xff]
        %v1073 = vrot.slane %v1041, 4
        %v1074 = vadd.f32 %v1041, %v1073
        %v1075 = vrot.slane %v1074, 2
        %v1076 = vadd.f32 %v1074, %v1075
        %v1077 = vrot.slane %v1076, 1
        %v1078 = vadd.f32 %v1076, %v1077
        %v1079 = vrot.slane %v1042, 4
        %v1080 = vadd.f32 %v1042, %v1079
        %v1081 = vrot.slane %v1080, 2
        %v1082 = vadd.f32 %v1080, %v1081
        %v1083 = vrot.slane %v1082, 1
        %v1084 = vadd.f32 %v1082, %v1083
        %v1085 = vrot.slane %v1043, 4
        %v1086 = vadd.f32 %v1043, %v1085
        %v1087 = vrot.slane %v1086, 2
        %v1088 = vadd.f32 %v1086, %v1087
        %v1089 = vrot.slane %v1088, 1
        %v1090 = vadd.f32 %v1088, %v1089
        %v1091 = vrot.slane %v1044, 4
        %v1092 = vadd.f32 %v1044, %v1091
        %v1093 = vrot.slane %v1092, 2
        %v1094 = vadd.f32 %v1092, %v1093
        %v1095 = vrot.slane %v1094, 1
        %v1096 = vadd.f32 %v1094, %v1095
        %v1097 = vrot.slane %v1045, 4
        %v1098 = vadd.f32 %v1045, %v1097
        %v1099 = vrot.slane %v1098, 2
        %v1100 = vadd.f32 %v1098, %v1099
        %v1101 = vrot.slane %v1100, 1
        %v1102 = vadd.f32 %v1100, %v1101
        %v1103 = vrot.slane %v1046, 4
        %v1104 = vadd.f32 %v1046, %v1103
        %v1105 = vrot.slane %v1104, 2
        %v1106 = vadd.f32 %v1104, %v1105
        %v1107 = vrot.slane %v1106, 1
        %v1108 = vadd.f32 %v1106, %v1107
        %v1109 = vrot.slane %v1047, 4
        %v1110 = vadd.f32 %v1047, %v1109
        %v1111 = vrot.slane %v1110, 2
        %v1112 = vadd.f32 %v1110, %v1111
        %v1113 = vrot.slane %v1112, 1
        %v1114 = vadd.f32 %v1112, %v1113
        %v1115 = vrot.slane %v1048, 4
        %v1116 = vadd.f32 %v1048, %v1115
        %v1117 = vrot.slane %v1116, 2
        %v1118 = vadd.f32 %v1116, %v1117
        %v1119 = vrot.slane %v1118, 1
        %v1120 = vadd.f32 %v1118, %v1119
        %v1121 = vadd.f32 %v745, %v1078
        %v1122 = vadd.f32 %v746, %v1084
        %v1123 = vadd.f32 %v747, %v1090
        %v1124 = vadd.f32 %v748, %v1096
        %v1125 = vadd.f32 %v749, %v1102
        %v1126 = vadd.f32 %v750, %v1108
        %v1127 = vadd.f32 %v751, %v1114
        %v1128 = vadd.f32 %v752, %v1120
        %v1129 = vmul.f32 %v1041, %v1057
        %v1130 = vmul.f32 %v1042, %v1058
        %v1131 = vmul.f32 %v1043, %v1059
        %v1132 = vmul.f32 %v1044, %v1060
        %v1133 = vmul.f32 %v1045, %v1061
        %v1134 = vmul.f32 %v1046, %v1062
        %v1135 = vmul.f32 %v1047, %v1063
        %v1136 = vmul.f32 %v1048, %v1064
        %v1137 = vmul.f32 %v1049, %v1065
        %v1138 = vmul.f32 %v1050, %v1066
        %v1139 = vmul.f32 %v1051, %v1067
        %v1140 = vmul.f32 %v1052, %v1068
        %v1141 = vmul.f32 %v1053, %v1069
        %v1142 = vmul.f32 %v1054, %v1070
        %v1143 = vmul.f32 %v1055, %v1071
        %v1144 = vmul.f32 %v1056, %v1072
        %v1145 = vsub.f32 %v1129, %v1137
        %v1146 = vsub.f32 %v1130, %v1138
        %v1147 = vsub.f32 %v1131, %v1139
        %v1148 = vsub.f32 %v1132, %v1140
        %v1149 = vsub.f32 %v1133, %v1141
        %v1150 = vsub.f32 %v1134, %v1142
        %v1151 = vsub.f32 %v1135, %v1143
        %v1152 = vsub.f32 %v1136, %v1144
        %v1153 = vmul.f32 %v1041, %v1065
        %v1154 = vmul.f32 %v1042, %v1066
        %v1155 = vmul.f32 %v1043, %v1067
        %v1156 = vmul.f32 %v1044, %v1068
        %v1157 = vmul.f32 %v1045, %v1069
        %v1158 = vmul.f32 %v1046, %v1070
        %v1159 = vmul.f32 %v1047, %v1071
        %v1160 = vmul.f32 %v1048, %v1072
        %v1161 = vmul.f32 %v1049, %v1057
        %v1162 = vmul.f32 %v1050, %v1058
        %v1163 = vmul.f32 %v1051, %v1059
        %v1164 = vmul.f32 %v1052, %v1060
        %v1165 = vmul.f32 %v1053, %v1061
        %v1166 = vmul.f32 %v1054, %v1062
        %v1167 = vmul.f32 %v1055, %v1063
        %v1168 = vmul.f32 %v1056, %v1064
        %v1169 = vadd.f32 %v1153, %v1161
        %v1170 = vadd.f32 %v1154, %v1162
        %v1171 = vadd.f32 %v1155, %v1163
        %v1172 = vadd.f32 %v1156, %v1164
        %v1173 = vadd.f32 %v1157, %v1165
        %v1174 = vadd.f32 %v1158, %v1166
        %v1175 = vadd.f32 %v1159, %v1167
        %v1176 = vadd.f32 %v1160, %v1168
        %v1177 = vrot.slane %v1145, 4
        %v1178 = vadd.f32 %v1145, %v1177
        %v1179 = vrot.slane %v1178, 2
        %v1180 = vadd.f32 %v1178, %v1179
        %v1181 = vrot.slane %v1180, 1
        %v1182 = vadd.f32 %v1180, %v1181
        %v1183 = vrot.slane %v1146, 4
        %v1184 = vadd.f32 %v1146, %v1183
        %v1185 = vrot.slane %v1184, 2
        %v1186 = vadd.f32 %v1184, %v1185
        %v1187 = vrot.slane %v1186, 1
        %v1188 = vadd.f32 %v1186, %v1187
        %v1189 = vrot.slane %v1147, 4
        %v1190 = vadd.f32 %v1147, %v1189
        %v1191 = vrot.slane %v1190, 2
        %v1192 = vadd.f32 %v1190, %v1191
        %v1193 = vrot.slane %v1192, 1
        %v1194 = vadd.f32 %v1192, %v1193
        %v1195 = vrot.slane %v1148, 4
        %v1196 = vadd.f32 %v1148, %v1195
        %v1197 = vrot.slane %v1196, 2
        %v1198 = vadd.f32 %v1196, %v1197
        %v1199 = vrot.slane %v1198, 1
        %v1200 = vadd.f32 %v1198, %v1199
        %v1201 = vrot.slane %v1149, 4
        %v1202 = vadd.f32 %v1149, %v1201
        %v1203 = vrot.slane %v1202, 2
        %v1204 = vadd.f32 %v1202, %v1203
        %v1205 = vrot.slane %v1204, 1
        %v1206 = vadd.f32 %v1204, %v1205
        %v1207 = vrot.slane %v1150, 4
        %v1208 = vadd.f32 %v1150, %v1207
        %v1209 = vrot.slane %v1208, 2
        %v1210 = vadd.f32 %v1208, %v1209
        %v1211 = vrot.slane %v1210, 1
        %v1212 = vadd.f32 %v1210, %v1211
        %v1213 = vrot.slane %v1151, 4
        %v1214 = vadd.f32 %v1151, %v1213
        %v1215 = vrot.slane %v1214, 2
        %v1216 = vadd.f32 %v1214, %v1215
        %v1217 = vrot.slane %v1216, 1
        %v1218 = vadd.f32 %v1216, %v1217
        %v1219 = vrot.slane %v1152, 4
        %v1220 = vadd.f32 %v1152, %v1219
        %v1221 = vrot.slane %v1220, 2
        %v1222 = vadd.f32 %v1220, %v1221
        %v1223 = vrot.slane %v1222, 1
        %v1224 = vadd.f32 %v1222, %v1223
        %v1225 = vadd.f32 %v849, %v1182
        %v1226 = vadd.f32 %v850, %v1188
        %v1227 = vadd.f32 %v851, %v1194
        %v1228 = vadd.f32 %v852, %v1200
        %v1229 = vadd.f32 %v853, %v1206
        %v1230 = vadd.f32 %v854, %v1212
        %v1231 = vadd.f32 %v855, %v1218
        %v1232 = vadd.f32 %v856, %v1224
        %v1233 = vmul.f32 %v1145, %v1057
        %v1234 = vmul.f32 %v1146, %v1058
        %v1235 = vmul.f32 %v1147, %v1059
        %v1236 = vmul.f32 %v1148, %v1060
        %v1237 = vmul.f32 %v1149, %v1061
        %v1238 = vmul.f32 %v1150, %v1062
        %v1239 = vmul.f32 %v1151, %v1063
        %v1240 = vmul.f32 %v1152, %v1064
        %v1241 = vmul.f32 %v1169, %v1065
        %v1242 = vmul.f32 %v1170, %v1066
        %v1243 = vmul.f32 %v1171, %v1067
        %v1244 = vmul.f32 %v1172, %v1068
        %v1245 = vmul.f32 %v1173, %v1069
        %v1246 = vmul.f32 %v1174, %v1070
        %v1247 = vmul.f32 %v1175, %v1071
        %v1248 = vmul.f32 %v1176, %v1072
        %v1249 = vsub.f32 %v1233, %v1241
        %v1250 = vsub.f32 %v1234, %v1242
        %v1251 = vsub.f32 %v1235, %v1243
        %v1252 = vsub.f32 %v1236, %v1244
        %v1253 = vsub.f32 %v1237, %v1245
        %v1254 = vsub.f32 %v1238, %v1246
        %v1255 = vsub.f32 %v1239, %v1247
        %v1256 = vsub.f32 %v1240, %v1248
        %v1257 = vmul.f32 %v1145, %v1065
        %v1258 = vmul.f32 %v1146, %v1066
        %v1259 = vmul.f32 %v1147, %v1067
        %v1260 = vmul.f32 %v1148, %v1068
        %v1261 = vmul.f32 %v1149, %v1069
        %v1262 = vmul.f32 %v1150, %v1070
        %v1263 = vmul.f32 %v1151, %v1071
        %v1264 = vmul.f32 %v1152, %v1072
        %v1265 = vmul.f32 %v1169, %v1057
        %v1266 = vmul.f32 %v1170, %v1058
        %v1267 = vmul.f32 %v1171, %v1059
        %v1268 = vmul.f32 %v1172, %v1060
        %v1269 = vmul.f32 %v1173, %v1061
        %v1270 = vmul.f32 %v1174, %v1062
        %v1271 = vmul.f32 %v1175, %v1063
        %v1272 = vmul.f32 %v1176, %v1064
        %v1273 = vadd.f32 %v1257, %v1265
        %v1274 = vadd.f32 %v1258, %v1266
        %v1275 = vadd.f32 %v1259, %v1267
        %v1276 = vadd.f32 %v1260, %v1268
        %v1277 = vadd.f32 %v1261, %v1269
        %v1278 = vadd.f32 %v1262, %v1270
        %v1279 = vadd.f32 %v1263, %v1271
        %v1280 = vadd.f32 %v1264, %v1272
        %v1281 = vrot.slane %v1249, 4
        %v1282 = vadd.f32 %v1249, %v1281
        %v1283 = vrot.slane %v1282, 2
        %v1284 = vadd.f32 %v1282, %v1283
        %v1285 = vrot.slane %v1284, 1
        %v1286 = vadd.f32 %v1284, %v1285
        %v1287 = vrot.slane %v1250, 4
        %v1288 = vadd.f32 %v1250, %v1287
        %v1289 = vrot.slane %v1288, 2
        %v1290 = vadd.f32 %v1288, %v1289
        %v1291 = vrot.slane %v1290, 1
        %v1292 = vadd.f32 %v1290, %v1291
        %v1293 = vrot.slane %v1251, 4
        %v1294 = vadd.f32 %v1251, %v1293
        %v1295 = vrot.slane %v1294, 2
        %v1296 = vadd.f32 %v1294, %v1295
        %v1297 = vrot.slane %v1296, 1
        %v1298 = vadd.f32 %v1296, %v1297
        %v1299 = vrot.slane %v1252, 4
        %v1300 = vadd.f32 %v1252, %v1299
        %v1301 = vrot.slane %v1300, 2
        %v1302 = vadd.f32 %v1300, %v1301
        %v1303 = vrot.slane %v1302, 1
        %v1304 = vadd.f32 %v1302, %v1303
        %v1305 = vrot.slane %v1253, 4
        %v1306 = vadd.f32 %v1253, %v1305
        %v1307 = vrot.slane %v1306, 2
        %v1308 = vadd.f32 %v1306, %v1307
        %v1309 = vrot.slane %v1308, 1
        %v1310 = vadd.f32 %v1308, %v1309
        %v1311 = vrot.slane %v1254, 4
        %v1312 = vadd.f32 %v1254, %v1311
        %v1313 = vrot.slane %v1312, 2
        %v1314 = vadd.f32 %v1312, %v1313
        %v1315 = vrot.slane %v1314, 1
        %v1316 = vadd.f32 %v1314, %v1315
        %v1317 = vrot.slane %v1255, 4
        %v1318 = vadd.f32 %v1255, %v1317
        %v1319 = vrot.slane %v1318, 2
        %v1320 = vadd.f32 %v1318, %v1319
        %v1321 = vrot.slane %v1320, 1
        %v1322 = vadd.f32 %v1320, %v1321
        %v1323 = vrot.slane %v1256, 4
        %v1324 = vadd.f32 %v1256, %v1323
        %v1325 = vrot.slane %v1324, 2
        %v1326 = vadd.f32 %v1324, %v1325
        %v1327 = vrot.slane %v1326, 1
        %v1328 = vadd.f32 %v1326, %v1327
        %v1329 = vadd.f32 %v953, %v1286
        %v1330 = vadd.f32 %v954, %v1292
        %v1331 = vadd.f32 %v955, %v1298
        %v1332 = vadd.f32 %v956, %v1304
        %v1333 = vadd.f32 %v957, %v1310
        %v1334 = vadd.f32 %v958, %v1316
        %v1335 = vadd.f32 %v959, %v1322
        %v1336 = vadd.f32 %v960, %v1328
        %v1337 = vmul.f32 %v1249, %v1057
        %v1338 = vmul.f32 %v1250, %v1058
        %v1339 = vmul.f32 %v1251, %v1059
        %v1340 = vmul.f32 %v1252, %v1060
        %v1341 = vmul.f32 %v1253, %v1061
        %v1342 = vmul.f32 %v1254, %v1062
        %v1343 = vmul.f32 %v1255, %v1063
        %v1344 = vmul.f32 %v1256, %v1064
        %v1345 = vmul.f32 %v1273, %v1065
        %v1346 = vmul.f32 %v1274, %v1066
        %v1347 = vmul.f32 %v1275, %v1067
        %v1348 = vmul.f32 %v1276, %v1068
        %v1349 = vmul.f32 %v1277, %v1069
        %v1350 = vmul.f32 %v1278, %v1070
        %v1351 = vmul.f32 %v1279, %v1071
        %v1352 = vmul.f32 %v1280, %v1072
        %v1353 = vsub.f32 %v1337, %v1345
        %v1354 = vsub.f32 %v1338, %v1346
        %v1355 = vsub.f32 %v1339, %v1347
        %v1356 = vsub.f32 %v1340, %v1348
        %v1357 = vsub.f32 %v1341, %v1349
        %v1358 = vsub.f32 %v1342, %v1350
        %v1359 = vsub.f32 %v1343, %v1351
        %v1360 = vsub.f32 %v1344, %v1352
        %v1361 = vrot.slane %v1353, 4
        %v1362 = vadd.f32 %v1353, %v1361
        %v1363 = vrot.slane %v1362, 2
        %v1364 = vadd.f32 %v1362, %v1363
        %v1365 = vrot.slane %v1364, 1
        %v1366 = vadd.f32 %v1364, %v1365
        %v1367 = vrot.slane %v1354, 4
        %v1368 = vadd.f32 %v1354, %v1367
        %v1369 = vrot.slane %v1368, 2
        %v1370 = vadd.f32 %v1368, %v1369
        %v1371 = vrot.slane %v1370, 1
        %v1372 = vadd.f32 %v1370, %v1371
        %v1373 = vrot.slane %v1355, 4
        %v1374 = vadd.f32 %v1355, %v1373
        %v1375 = vrot.slane %v1374, 2
        %v1376 = vadd.f32 %v1374, %v1375
        %v1377 = vrot.slane %v1376, 1
        %v1378 = vadd.f32 %v1376, %v1377
        %v1379 = vrot.slane %v1356, 4
        %v1380 = vadd.f32 %v1356, %v1379
        %v1381 = vrot.slane %v1380, 2
        %v1382 = vadd.f32 %v1380, %v1381
        %v1383 = vrot.slane %v1382, 1
        %v1384 = vadd.f32 %v1382, %v1383
        %v1385 = vrot.slane %v1357, 4
        %v1386 = vadd.f32 %v1357, %v1385
        %v1387 = vrot.slane %v1386, 2
        %v1388 = vadd.f32 %v1386, %v1387
        %v1389 = vrot.slane %v1388, 1
        %v1390 = vadd.f32 %v1388, %v1389
        %v1391 = vrot.slane %v1358, 4
        %v1392 = vadd.f32 %v1358, %v1391
        %v1393 = vrot.slane %v1392, 2
        %v1394 = vadd.f32 %v1392, %v1393
        %v1395 = vrot.slane %v1394, 1
        %v1396 = vadd.f32 %v1394, %v1395
        %v1397 = vrot.slane %v1359, 4
        %v1398 = vadd.f32 %v1359, %v1397
        %v1399 = vrot.slane %v1398, 2
        %v1400 = vadd.f32 %v1398, %v1399
        %v1401 = vrot.slane %v1400, 1
        %v1402 = vadd.f32 %v1400, %v1401
        %v1403 = vrot.slane %v1360, 4
        %v1404 = vadd.f32 %v1360, %v1403
        %v1405 = vrot.slane %v1404, 2
        %v1406 = vadd.f32 %v1404, %v1405
        %v1407 = vrot.slane %v1406, 1
        %v1408 = vadd.f32 %v1406, %v1407
        %v1409 = vadd.f32 %v1033, %v1366
        %v1410 = vadd.f32 %v1034, %v1372
        %v1411 = vadd.f32 %v1035, %v1378
        %v1412 = vadd.f32 %v1036, %v1384
        %v1413 = vadd.f32 %v1037, %v1390
        %v1414 = vadd.f32 %v1038, %v1396
        %v1415 = vadd.f32 %v1039, %v1402
        %v1416 = vadd.f32 %v1040, %v1408
        %v1417 = vld [vmem:[%s287 + $0x18] sm:$0xff]
        %v1418 = vld [vmem:[%s287 + $0x58] sm:$0xff]
        %v1419 = vld [vmem:[%s287 + $0x98] sm:$0xff]
        %v1420 = vld [vmem:[%s287 + $0xd8] sm:$0xff]
        %v1421 = vld [vmem:[%s287 + $0x118] sm:$0xff]
        %v1422 = vld [vmem:[%s287 + $0x158] sm:$0xff]
        %v1423 = vld [vmem:[%s287 + $0x198] sm:$0xff]
        %v1424 = vld [vmem:[%s287 + $0x1d8] sm:$0xff]
        %v1425 = vld [vmem:[%s327 + $0x18] sm:$0xff]
        %v1426 = vld [vmem:[%s327 + $0x58] sm:$0xff]
        %v1427 = vld [vmem:[%s327 + $0x98] sm:$0xff]
        %v1428 = vld [vmem:[%s327 + $0xd8] sm:$0xff]
        %v1429 = vld [vmem:[%s327 + $0x118] sm:$0xff]
        %v1430 = vld [vmem:[%s327 + $0x158] sm:$0xff]
        %v1431 = vld [vmem:[%s327 + $0x198] sm:$0xff]
        %v1432 = vld [vmem:[%s327 + $0x1d8] sm:$0xff]
        %v1433 = vld [vmem:[%s294 + $0x18] sm:$0xff]
        %v1434 = vld [vmem:[%s294 + $0x58] sm:$0xff]
        %v1435 = vld [vmem:[%s294 + $0x98] sm:$0xff]
        %v1436 = vld [vmem:[%s294 + $0xd8] sm:$0xff]
        %v1437 = vld [vmem:[%s294 + $0x118] sm:$0xff]
        %v1438 = vld [vmem:[%s294 + $0x158] sm:$0xff]
        %v1439 = vld [vmem:[%s294 + $0x198] sm:$0xff]
        %v1440 = vld [vmem:[%s294 + $0x1d8] sm:$0xff]
        %v1441 = vld [vmem:[%s344 + $0x18] sm:$0xff]
        %v1442 = vld [vmem:[%s344 + $0x58] sm:$0xff]
        %v1443 = vld [vmem:[%s344 + $0x98] sm:$0xff]
        %v1444 = vld [vmem:[%s344 + $0xd8] sm:$0xff]
        %v1445 = vld [vmem:[%s344 + $0x118] sm:$0xff]
        %v1446 = vld [vmem:[%s344 + $0x158] sm:$0xff]
        %v1447 = vld [vmem:[%s344 + $0x198] sm:$0xff]
        %v1448 = vld [vmem:[%s344 + $0x1d8] sm:$0xff]
        %v1449 = vrot.slane %v1417, 4
        %v1450 = vadd.f32 %v1417, %v1449
        %v1451 = vrot.slane %v1450, 2
        %v1452 = vadd.f32 %v1450, %v1451
        %v1453 = vrot.slane %v1452, 1
        %v1454 = vadd.f32 %v1452, %v1453
        %v1455 = vrot.slane %v1418, 4
        %v1456 = vadd.f32 %v1418, %v1455
        %v1457 = vrot.slane %v1456, 2
        %v1458 = vadd.f32 %v1456, %v1457
        %v1459 = vrot.slane %v1458, 1
        %v1460 = vadd.f32 %v1458, %v1459
        %v1461 = vrot.slane %v1419, 4
        %v1462 = vadd.f32 %v1419, %v1461
        %v1463 = vrot.slane %v1462, 2
        %v1464 = vadd.f32 %v1462, %v1463
        %v1465 = vrot.slane %v1464, 1
        %v1466 = vadd.f32 %v1464, %v1465
        %v1467 = vrot.slane %v1420, 4
        %v1468 = vadd.f32 %v1420, %v1467
        %v1469 = vrot.slane %v1468, 2
        %v1470 = vadd.f32 %v1468, %v1469
        %v1471 = vrot.slane %v1470, 1
        %v1472 = vadd.f32 %v1470, %v1471
        %v1473 = vrot.slane %v1421, 4
        %v1474 = vadd.f32 %v1421, %v1473
        %v1475 = vrot.slane %v1474, 2
        %v1476 = vadd.f32 %v1474, %v1475
        %v1477 = vrot.slane %v1476, 1
        %v1478 = vadd.f32 %v1476, %v1477
        %v1479 = vrot.slane %v1422, 4
        %v1480 = vadd.f32 %v1422, %v1479
        %v1481 = vrot.slane %v1480, 2
        %v1482 = vadd.f32 %v1480, %v1481
        %v1483 = vrot.slane %v1482, 1
        %v1484 = vadd.f32 %v1482, %v1483
        %v1485 = vrot.slane %v1423, 4
        %v1486 = vadd.f32 %v1423, %v1485
        %v1487 = vrot.slane %v1486, 2
        %v1488 = vadd.f32 %v1486, %v1487
        %v1489 = vrot.slane %v1488, 1
        %v1490 = vadd.f32 %v1488, %v1489
        %v1491 = vrot.slane %v1424, 4
        %v1492 = vadd.f32 %v1424, %v1491
        %v1493 = vrot.slane %v1492, 2
        %v1494 = vadd.f32 %v1492, %v1493
        %v1495 = vrot.slane %v1494, 1
        %v1496 = vadd.f32 %v1494, %v1495
        %v1497 = vadd.f32 %v1121, %v1454
        %v1498 = vadd.f32 %v1122, %v1460
        %v1499 = vadd.f32 %v1123, %v1466
        %v1500 = vadd.f32 %v1124, %v1472
        %v1501 = vadd.f32 %v1125, %v1478
        %v1502 = vadd.f32 %v1126, %v1484
        %v1503 = vadd.f32 %v1127, %v1490
        %v1504 = vadd.f32 %v1128, %v1496
        %v1505 = vmul.f32 %v1417, %v1433
        %v1506 = vmul.f32 %v1418, %v1434
        %v1507 = vmul.f32 %v1419, %v1435
        %v1508 = vmul.f32 %v1420, %v1436
        %v1509 = vmul.f32 %v1421, %v1437
        %v1510 = vmul.f32 %v1422, %v1438
        %v1511 = vmul.f32 %v1423, %v1439
        %v1512 = vmul.f32 %v1424, %v1440
        %v1513 = vmul.f32 %v1425, %v1441
        %v1514 = vmul.f32 %v1426, %v1442
        %v1515 = vmul.f32 %v1427, %v1443
        %v1516 = vmul.f32 %v1428, %v1444
        %v1517 = vmul.f32 %v1429, %v1445
        %v1518 = vmul.f32 %v1430, %v1446
        %v1519 = vmul.f32 %v1431, %v1447
        %v1520 = vmul.f32 %v1432, %v1448
        %v1521 = vsub.f32 %v1505, %v1513
        %v1522 = vsub.f32 %v1506, %v1514
        %v1523 = vsub.f32 %v1507, %v1515
        %v1524 = vsub.f32 %v1508, %v1516
        %v1525 = vsub.f32 %v1509, %v1517
        %v1526 = vsub.f32 %v1510, %v1518
        %v1527 = vsub.f32 %v1511, %v1519
        %v1528 = vsub.f32 %v1512, %v1520
        %v1529 = vmul.f32 %v1417, %v1441
        %v1530 = vmul.f32 %v1418, %v1442
        %v1531 = vmul.f32 %v1419, %v1443
        %v1532 = vmul.f32 %v1420, %v1444
        %v1533 = vmul.f32 %v1421, %v1445
        %v1534 = vmul.f32 %v1422, %v1446
        %v1535 = vmul.f32 %v1423, %v1447
        %v1536 = vmul.f32 %v1424, %v1448
        %v1537 = vmul.f32 %v1425, %v1433
        %v1538 = vmul.f32 %v1426, %v1434
        %v1539 = vmul.f32 %v1427, %v1435
        %v1540 = vmul.f32 %v1428, %v1436
        %v1541 = vmul.f32 %v1429, %v1437
        %v1542 = vmul.f32 %v1430, %v1438
        %v1543 = vmul.f32 %v1431, %v1439
        %v1544 = vmul.f32 %v1432, %v1440
        %v1545 = vadd.f32 %v1529, %v1537
        %v1546 = vadd.f32 %v1530, %v1538
        %v1547 = vadd.f32 %v1531, %v1539
        %v1548 = vadd.f32 %v1532, %v1540
        %v1549 = vadd.f32 %v1533, %v1541
        %v1550 = vadd.f32 %v1534, %v1542
        %v1551 = vadd.f32 %v1535, %v1543
        %v1552 = vadd.f32 %v1536, %v1544
        %v1553 = vrot.slane %v1521, 4
        %v1554 = vadd.f32 %v1521, %v1553
        %v1555 = vrot.slane %v1554, 2
        %v1556 = vadd.f32 %v1554, %v1555
        %v1557 = vrot.slane %v1556, 1
        %v1558 = vadd.f32 %v1556, %v1557
        %v1559 = vrot.slane %v1522, 4
        %v1560 = vadd.f32 %v1522, %v1559
        %v1561 = vrot.slane %v1560, 2
        %v1562 = vadd.f32 %v1560, %v1561
        %v1563 = vrot.slane %v1562, 1
        %v1564 = vadd.f32 %v1562, %v1563
        %v1565 = vrot.slane %v1523, 4
        %v1566 = vadd.f32 %v1523, %v1565
        %v1567 = vrot.slane %v1566, 2
        %v1568 = vadd.f32 %v1566, %v1567
        %v1569 = vrot.slane %v1568, 1
        %v1570 = vadd.f32 %v1568, %v1569
        %v1571 = vrot.slane %v1524, 4
        %v1572 = vadd.f32 %v1524, %v1571
        %v1573 = vrot.slane %v1572, 2
        %v1574 = vadd.f32 %v1572, %v1573
        %v1575 = vrot.slane %v1574, 1
        %v1576 = vadd.f32 %v1574, %v1575
        %v1577 = vrot.slane %v1525, 4
        %v1578 = vadd.f32 %v1525, %v1577
        %v1579 = vrot.slane %v1578, 2
        %v1580 = vadd.f32 %v1578, %v1579
        %v1581 = vrot.slane %v1580, 1
        %v1582 = vadd.f32 %v1580, %v1581
        %v1583 = vrot.slane %v1526, 4
        %v1584 = vadd.f32 %v1526, %v1583
        %v1585 = vrot.slane %v1584, 2
        %v1586 = vadd.f32 %v1584, %v1585
        %v1587 = vrot.slane %v1586, 1
        %v1588 = vadd.f32 %v1586, %v1587
        %v1589 = vrot.slane %v1527, 4
        %v1590 = vadd.f32 %v1527, %v1589
        %v1591 = vrot.slane %v1590, 2
        %v1592 = vadd.f32 %v1590, %v1591
        %v1593 = vrot.slane %v1592, 1
        %v1594 = vadd.f32 %v1592, %v1593
        %v1595 = vrot.slane %v1528, 4
        %v1596 = vadd.f32 %v1528, %v1595
        %v1597 = vrot.slane %v1596, 2
        %v1598 = vadd.f32 %v1596, %v1597
        %v1599 = vrot.slane %v1598, 1
        %v1600 = vadd.f32 %v1598, %v1599
        %v1601 = vadd.f32 %v1225, %v1558
        %v1602 = vadd.f32 %v1226, %v1564
        %v1603 = vadd.f32 %v1227, %v1570
        %v1604 = vadd.f32 %v1228, %v1576
        %v1605 = vadd.f32 %v1229, %v1582
        %v1606 = vadd.f32 %v1230, %v1588
        %v1607 = vadd.f32 %v1231, %v1594
        %v1608 = vadd.f32 %v1232, %v1600
        %v1609 = vmul.f32 %v1521, %v1433
        %v1610 = vmul.f32 %v1522, %v1434
        %v1611 = vmul.f32 %v1523, %v1435
        %v1612 = vmul.f32 %v1524, %v1436
        %v1613 = vmul.f32 %v1525, %v1437
        %v1614 = vmul.f32 %v1526, %v1438
        %v1615 = vmul.f32 %v1527, %v1439
        %v1616 = vmul.f32 %v1528, %v1440
        %v1617 = vmul.f32 %v1545, %v1441
        %v1618 = vmul.f32 %v1546, %v1442
        %v1619 = vmul.f32 %v1547, %v1443
        %v1620 = vmul.f32 %v1548, %v1444
        %v1621 = vmul.f32 %v1549, %v1445
        %v1622 = vmul.f32 %v1550, %v1446
        %v1623 = vmul.f32 %v1551, %v1447
        %v1624 = vmul.f32 %v1552, %v1448
        %v1625 = vsub.f32 %v1609, %v1617
        %v1626 = vsub.f32 %v1610, %v1618
        %v1627 = vsub.f32 %v1611, %v1619
        %v1628 = vsub.f32 %v1612, %v1620
        %v1629 = vsub.f32 %v1613, %v1621
        %v1630 = vsub.f32 %v1614, %v1622
        %v1631 = vsub.f32 %v1615, %v1623
        %v1632 = vsub.f32 %v1616, %v1624
        %v1633 = vmul.f32 %v1521, %v1441
        %v1634 = vmul.f32 %v1522, %v1442
        %v1635 = vmul.f32 %v1523, %v1443
        %v1636 = vmul.f32 %v1524, %v1444
        %v1637 = vmul.f32 %v1525, %v1445
        %v1638 = vmul.f32 %v1526, %v1446
        %v1639 = vmul.f32 %v1527, %v1447
        %v1640 = vmul.f32 %v1528, %v1448
        %v1641 = vmul.f32 %v1545, %v1433
        %v1642 = vmul.f32 %v1546, %v1434
        %v1643 = vmul.f32 %v1547, %v1435
        %v1644 = vmul.f32 %v1548, %v1436
        %v1645 = vmul.f32 %v1549, %v1437
        %v1646 = vmul.f32 %v1550, %v1438
        %v1647 = vmul.f32 %v1551, %v1439
        %v1648 = vmul.f32 %v1552, %v1440
        %v1649 = vadd.f32 %v1633, %v1641
        %v1650 = vadd.f32 %v1634, %v1642
        %v1651 = vadd.f32 %v1635, %v1643
        %v1652 = vadd.f32 %v1636, %v1644
        %v1653 = vadd.f32 %v1637, %v1645
        %v1654 = vadd.f32 %v1638, %v1646
        %v1655 = vadd.f32 %v1639, %v1647
        %v1656 = vadd.f32 %v1640, %v1648
        %v1657 = vrot.slane %v1625, 4
        %v1658 = vadd.f32 %v1625, %v1657
        %v1659 = vrot.slane %v1658, 2
        %v1660 = vadd.f32 %v1658, %v1659
        %v1661 = vrot.slane %v1660, 1
        %v1662 = vadd.f32 %v1660, %v1661
        %v1663 = vrot.slane %v1626, 4
        %v1664 = vadd.f32 %v1626, %v1663
        %v1665 = vrot.slane %v1664, 2
        %v1666 = vadd.f32 %v1664, %v1665
        %v1667 = vrot.slane %v1666, 1
        %v1668 = vadd.f32 %v1666, %v1667
        %v1669 = vrot.slane %v1627, 4
        %v1670 = vadd.f32 %v1627, %v1669
        %v1671 = vrot.slane %v1670, 2
        %v1672 = vadd.f32 %v1670, %v1671
        %v1673 = vrot.slane %v1672, 1
        %v1674 = vadd.f32 %v1672, %v1673
        %v1675 = vrot.slane %v1628, 4
        %v1676 = vadd.f32 %v1628, %v1675
        %v1677 = vrot.slane %v1676, 2
        %v1678 = vadd.f32 %v1676, %v1677
        %v1679 = vrot.slane %v1678, 1
        %v1680 = vadd.f32 %v1678, %v1679
        %v1681 = vrot.slane %v1629, 4
        %v1682 = vadd.f32 %v1629, %v1681
        %v1683 = vrot.slane %v1682, 2
        %v1684 = vadd.f32 %v1682, %v1683
        %v1685 = vrot.slane %v1684, 1
        %v1686 = vadd.f32 %v1684, %v1685
        %v1687 = vrot.slane %v1630, 4
        %v1688 = vadd.f32 %v1630, %v1687
        %v1689 = vrot.slane %v1688, 2
        %v1690 = vadd.f32 %v1688, %v1689
        %v1691 = vrot.slane %v1690, 1
        %v1692 = vadd.f32 %v1690, %v1691
        %v1693 = vrot.slane %v1631, 4
        %v1694 = vadd.f32 %v1631, %v1693
        %v1695 = vrot.slane %v1694, 2
        %v1696 = vadd.f32 %v1694, %v1695
        %v1697 = vrot.slane %v1696, 1
        %v1698 = vadd.f32 %v1696, %v1697
        %v1699 = vrot.slane %v1632, 4
        %v1700 = vadd.f32 %v1632, %v1699
        %v1701 = vrot.slane %v1700, 2
        %v1702 = vadd.f32 %v1700, %v1701
        %v1703 = vrot.slane %v1702, 1
        %v1704 = vadd.f32 %v1702, %v1703
        %v1705 = vadd.f32 %v1329, %v1662
        %v1706 = vadd.f32 %v1330, %v1668
        %v1707 = vadd.f32 %v1331, %v1674
        %v1708 = vadd.f32 %v1332, %v1680
        %v1709 = vadd.f32 %v1333, %v1686
        %v1710 = vadd.f32 %v1334, %v1692
        %v1711 = vadd.f32 %v1335, %v1698
        %v1712 = vadd.f32 %v1336, %v1704
        %v1713 = vmul.f32 %v1625, %v1433
        %v1714 = vmul.f32 %v1626, %v1434
        %v1715 = vmul.f32 %v1627, %v1435
        %v1716 = vmul.f32 %v1628, %v1436
        %v1717 = vmul.f32 %v1629, %v1437
        %v1718 = vmul.f32 %v1630, %v1438
        %v1719 = vmul.f32 %v1631, %v1439
        %v1720 = vmul.f32 %v1632, %v1440
        %v1721 = vmul.f32 %v1649, %v1441
        %v1722 = vmul.f32 %v1650, %v1442
        %v1723 = vmul.f32 %v1651, %v1443
        %v1724 = vmul.f32 %v1652, %v1444
        %v1725 = vmul.f32 %v1653, %v1445
        %v1726 = vmul.f32 %v1654, %v1446
        %v1727 = vmul.f32 %v1655, %v1447
        %v1728 = vmul.f32 %v1656, %v1448
        %v1729 = vsub.f32 %v1713, %v1721
        %v1730 = vsub.f32 %v1714, %v1722
        %v1731 = vsub.f32 %v1715, %v1723
        %v1732 = vsub.f32 %v1716, %v1724
        %v1733 = vsub.f32 %v1717, %v1725
        %v1734 = vsub.f32 %v1718, %v1726
        %v1735 = vsub.f32 %v1719, %v1727
        %v1736 = vsub.f32 %v1720, %v1728
        %v1737 = vrot.slane %v1729, 4
        %v1738 = vadd.f32 %v1729, %v1737
        %v1739 = vrot.slane %v1738, 2
        %v1740 = vadd.f32 %v1738, %v1739
        %v1741 = vrot.slane %v1740, 1
        %v1742 = vadd.f32 %v1740, %v1741
        %v1743 = vrot.slane %v1730, 4
        %v1744 = vadd.f32 %v1730, %v1743
        %v1745 = vrot.slane %v1744, 2
        %v1746 = vadd.f32 %v1744, %v1745
        %v1747 = vrot.slane %v1746, 1
        %v1748 = vadd.f32 %v1746, %v1747
        %v1749 = vrot.slane %v1731, 4
        %v1750 = vadd.f32 %v1731, %v1749
        %v1751 = vrot.slane %v1750, 2
        %v1752 = vadd.f32 %v1750, %v1751
        %v1753 = vrot.slane %v1752, 1
        %v1754 = vadd.f32 %v1752, %v1753
        %v1755 = vrot.slane %v1732, 4
        %v1756 = vadd.f32 %v1732, %v1755
        %v1757 = vrot.slane %v1756, 2
        %v1758 = vadd.f32 %v1756, %v1757
        %v1759 = vrot.slane %v1758, 1
        %v1760 = vadd.f32 %v1758, %v1759
        %v1761 = vrot.slane %v1733, 4
        %v1762 = vadd.f32 %v1733, %v1761
        %v1763 = vrot.slane %v1762, 2
        %v1764 = vadd.f32 %v1762, %v1763
        %v1765 = vrot.slane %v1764, 1
        %v1766 = vadd.f32 %v1764, %v1765
        %v1767 = vrot.slane %v1734, 4
        %v1768 = vadd.f32 %v1734, %v1767
        %v1769 = vrot.slane %v1768, 2
        %v1770 = vadd.f32 %v1768, %v1769
        %v1771 = vrot.slane %v1770, 1
        %v1772 = vadd.f32 %v1770, %v1771
        %v1773 = vrot.slane %v1735, 4
        %v1774 = vadd.f32 %v1735, %v1773
        %v1775 = vrot.slane %v1774, 2
        %v1776 = vadd.f32 %v1774, %v1775
        %v1777 = vrot.slane %v1776, 1
        %v1778 = vadd.f32 %v1776, %v1777
        %v1779 = vrot.slane %v1736, 4
        %v1780 = vadd.f32 %v1736, %v1779
        %v1781 = vrot.slane %v1780, 2
        %v1782 = vadd.f32 %v1780, %v1781
        %v1783 = vrot.slane %v1782, 1
        %v1784 = vadd.f32 %v1782, %v1783
        %v1785 = vadd.f32 %v1409, %v1742
        %v1786 = vadd.f32 %v1410, %v1748
        %v1787 = vadd.f32 %v1411, %v1754
        %v1788 = vadd.f32 %v1412, %v1760
        %v1789 = vadd.f32 %v1413, %v1766
        %v1790 = vadd.f32 %v1414, %v1772
        %v1791 = vadd.f32 %v1415, %v1778
        %v1792 = vadd.f32 %v1416, %v1784
        %vm1801 = vcmask 1041409
        %v1802 = vsel %vm1801, %v1498, %v1497
        %vm1803 = vcmask 1042434
        %v1804 = vsel %vm1803, %v1499, %v1802
        %vm1805 = vcmask 1043459
        %v1806 = vsel %vm1805, %v1500, %v1804
        %vm1807 = vcmask 1044484
        %v1808 = vsel %vm1807, %v1501, %v1806
        %vm1809 = vcmask 1045509
        %v1810 = vsel %vm1809, %v1502, %v1808
        %vm1811 = vcmask 1046534
        %v1812 = vsel %vm1811, %v1503, %v1810
        %vm1813 = vcmask 1047559
        %v1814 = vsel %vm1813, %v1504, %v1812
        %1816 = vst [vmem:[%s281] sm:$0xff] %v1814
        %v1825 = vsel %vm1801, %v1602, %v1601
        %v1826 = vsel %vm1803, %v1603, %v1825
        %v1827 = vsel %vm1805, %v1604, %v1826
        %v1828 = vsel %vm1807, %v1605, %v1827
        %v1829 = vsel %vm1809, %v1606, %v1828
        %v1830 = vsel %vm1811, %v1607, %v1829
        %v1831 = vsel %vm1813, %v1608, %v1830
        %1833 = vst [vmem:[%s281 + $0x8] sm:$0xff] %v1831
        %v1842 = vsel %vm1801, %v1706, %v1705
        %v1843 = vsel %vm1803, %v1707, %v1842
        %v1844 = vsel %vm1805, %v1708, %v1843
        %v1845 = vsel %vm1807, %v1709, %v1844
        %v1846 = vsel %vm1809, %v1710, %v1845
        %v1847 = vsel %vm1811, %v1711, %v1846
        %v1848 = vsel %vm1813, %v1712, %v1847
        %1850 = vst [vmem:[%s281 + $0x10] sm:$0xff] %v1848
        %v1859 = vsel %vm1801, %v1786, %v1785
        %v1860 = vsel %vm1803, %v1787, %v1859
        %v1861 = vsel %vm1805, %v1788, %v1860
        %v1862 = vsel %vm1807, %v1789, %v1861
        %v1863 = vsel %vm1809, %v1790, %v1862
        %v1864 = vsel %vm1811, %v1791, %v1863
        %v1865 = vsel %vm1813, %v1792, %v1864
        %1867 = vst [vmem:[%s281 + $0x18] sm:$0xff] %v1865
        %s1868 = sand.u32 %s148, 1
        %s1869 = scalar_lea.sflag [#allocation3], %s1868
        %s1870 = sand.u32 %s148, 1
        %s1871 = smul.addr %s1870, 32
        %s1872 = scalar_lea.vmem [#allocation2], %s1871
        // Predicated region
        $region37: #{s4d_forward.1} parent=35 // pred_check
          %p1873 = pneg %p158
        $region38: #{s4d_forward.1} parent=35 // pred_check_branch
          %1875 = sbr.rel (%p1873) target = $region40
        $region39: #{s4d_forward.1} parent=35 // pred_region
          %s1876 = smul.u32 4, %s23
          %s1878 = ssub.s32 512, 512
          %1879 = vsyncadd %s1869, %s1878
          %s1880 = smul.addr %s22, 4
          %s1881 = sadd.s32 %s1876, %s1880
          %s1882 = smul.addr %s1881, 128
          %s1883 = scalar_lea.hbm %s4, %s1882
          %s1885 = sshll.u32 %s1872, 4
          %s1886 = int_to_ptr.vmem [resolvable:$true] %s1885
          %1888 = dma.vmem_to_hbm [thread:$0]  %s1886, 512, %s1883, %s1869
        $region40: #{s4d_forward.1} parent=35 // pred_fallthru
          _
      $region36: #{s4d_forward.1} parent=5 // pred_fallthru
        _
      %p1889 = scmp.le.s32.totalorder 2, %s13
      // Predicated region
      $region41: #{s4d_forward.1} parent=5 // pred_check
        %p1890 = pneg %p1889
      $region42: #{s4d_forward.1} parent=5 // pred_check_branch
        %1892 = sbr.rel (%p1890) target = $region44
      $region43: #{s4d_forward.1} parent=5 // pred_region
        %s1893 = ssub.s32 %s13, 2
        // Predicated region
        $region45: #{s4d_forward.1} parent=43 // pred_check
          %p1894 = pneg %p164
        $region46: #{s4d_forward.1} parent=43 // pred_check_branch
          %1896 = sbr.rel (%p1894) target = $region48
        $region47: #{s4d_forward.1} parent=43 // pred_region
          %s1897 = sand.u32 %s149, 1
          %s1898 = scalar_lea.sflag [#allocation3], %s1897
          %s1899 = sand.u32 %s149, 1
          %s1900 = smul.addr %s1899, 32
          %s1901 = scalar_lea.vmem [#allocation2], %s1900
          %1902 = dma.done %s1898, 512
        $region48: #{s4d_forward.1} parent=43 // pred_fallthru
          _
      $region44: #{s4d_forward.1} parent=5 // pred_fallthru
        _
    $region6: #{s4d_forward.1} parent=1 // loop_footer
      %s17 = sadd.s32 1, %s13
    $region7: #{s4d_forward.1} parent=1 // loop_footer_branch
      %12 = sbr.rel target = $region3
    $region8: #{s4d_forward.1} parent=1 // loop_exit
      _
    %1903 = vsyncpa [#allocation3], 1
    %s1904 = scalar_lea.sflag [#allocation3], 1
    %1905 = vsyncpa %s1904, 1

</llo_original>
